<compile_context>
chip_gen: v5e
topology: v5e:2x2
jax: 0.10.0
libtpu: 0.0.40
codegen_flags: <defaults>
</compile_context>

<pallas_src>
import functools
from math import ceil

import numpy as np
import jax
import jax.numpy as jnp
from jax.experimental import pallas as pl
from jax.experimental.pallas import tpu as pltpu

EPS = 1e-15  # matches torch_geometric.nn.dense.diff_pool EPS


def _vmem():
    return pl.BlockSpec(memory_space=pltpu.MemorySpace.VMEM)


# ----------------------- in-kernel math (VMEM-resident) -----------------------

def _normalize_adj_math(adj):
    """GCNConv normalization for an unweighted symmetric dense adjacency:
       A_hat = binarize(adj) with (remaining) self loops, D^-1/2 A_hat D^-1/2."""
    n = adj.shape[0]
    adj_bin = (adj != 0).astype(jnp.float32)
    rows = jax.lax.broadcasted_iota(jnp.int32, (n, n), 0)
    cols = jax.lax.broadcasted_iota(jnp.int32, (n, n), 1)
    eye = (rows == cols).astype(jnp.float32)
    a_hat = jnp.maximum(adj_bin, eye)                  # add_remaining_self_loops
    deg_row = jnp.sum(a_hat, axis=1, keepdims=True)    # [N, 1]
    deg_col = jnp.sum(a_hat, axis=0, keepdims=True)    # [1, N] (symmetric adj)
    return jax.lax.rsqrt(deg_row) * a_hat * jax.lax.rsqrt(deg_col)


def _gcn_stack_math(a_norm, x, layers):
    """PyG BasicGNN(GCN) stack: h <- A_norm @ (h @ W) + b, ReLU between layers."""
    h = x
    last = len(layers) - 1
    for li, (w, b) in enumerate(layers):
        hw = jnp.dot(h, w, preferred_element_type=jnp.float32)
        h = jnp.dot(a_norm, hw, preferred_element_type=jnp.float32) + b
        if li < last:
            h = jnp.maximum(h, 0.0)
    return h


def _diff_pool_math(x, adj, s_logits, *, need_out_adj=True):
    """torch_geometric dense_diff_pool for the batch=1 / all-True-mask path."""
    n = x.shape[0]
    # softmax over clusters (exact division; see correctness note in review)
    m = jnp.max(s_logits, axis=-1, keepdims=True)
    e = jnp.exp(s_logits - m)
    s = e / jnp.sum(e, axis=-1, keepdims=True)          # [N, C]
    st = jnp.transpose(s)                               # [C, N]; reused below
    out_x = jnp.dot(st, x, preferred_element_type=jnp.float32)          # [C, F]
    out_adj = None
    if need_out_adj:
        st_adj = jnp.dot(st, adj, preferred_element_type=jnp.float32)   # [C, N]
        out_adj = jnp.dot(st_adj, s, preferred_element_type=jnp.float32)  # [C, C]
    sst = jnp.dot(s, st, preferred_element_type=jnp.float32)            # [N, N]
    diff = adj - sst
    link_loss = jnp.sqrt(jnp.sum(diff * diff)) / (n * n)   # ||.||_F / adj.numel()
    ent_loss = jnp.sum(-s * jnp.log(s + EPS)) / n          # mean over nodes
    return out_x, out_adj, link_loss, ent_loss


# ------------------------------- fused kernel --------------------------------

def _fused_forward_kernel(*refs, struct):
    """Whole DiffPool forward in one kernel invocation (no grid).

    refs = [x, adj,
            per level: (W, b) for each pool-GCN layer then each embed-GCN layer,
            out_x, losses]
    struct = tuple of (num_pool_gcn_layers, num_embed_gcn_layers) per level.
    """
    num_levels = len(struct)
    n_params = sum(2 * (p + e) for p, e in struct)
    x_ref, adj_ref = refs[0], refs[1]
    param_refs = refs[2:2 + n_params]
    out_x_ref, losses_ref = refs[2 + n_params], refs[3 + n_params]

    x = x_ref[...]
    adj = adj_ref[...]

    idx = 0
    levels = []
    for p_cnt, e_cnt in struct:
        pool_layers = [(param_refs[idx + 2 * k][...], param_refs[idx + 2 * k + 1][...])
                       for k in range(p_cnt)]
        idx += 2 * p_cnt
        embed_layers = [(param_refs[idx + 2 * k][...], param_refs[idx + 2 * k + 1][...])
                        for k in range(e_cnt)]
        idx += 2 * e_cnt
        levels.append((pool_layers, embed_layers))

    link_losses, ent_losses = [], []
    s = None
    for i, (pool_layers, embed_layers) in enumerate(levels):
        if i > 0:
            x, pooled_adj, link, ent = _diff_pool_math(x, adj, s)
            link_losses.append(link)
            ent_losses.append(ent)
            # dense_to_sparse -> to_dense_adj round trip == binarization;
            # stays in VMEM (no HBM round trip between levels).
            adj = (pooled_adj != 0).astype(jnp.float32)
        a_norm = _normalize_adj_math(adj)   # computed ONCE per level, reused
        s = _gcn_stack_math(a_norm, x, pool_layers)
        x = _gcn_stack_math(a_norm, x, embed_layers)

    out_x, _, link, ent = _diff_pool_math(x, adj, s, need_out_adj=False)
    link_losses.append(link)
    ent_losses.append(ent)

    out_x_ref[...] = out_x

    # Pack all loss scalars into one lane-dense [1, 128] row:
    #   lanes [0, L)  = link losses, lanes [L, 2L) = entropy losses.
    lane = jax.lax.broadcasted_iota(jnp.int32, (1, 128), 1)
    loss_row = jnp.zeros((1, 128), jnp.float32)
    for k, v in enumerate(link_losses):
        loss_row = jnp.where(lane == k, v.reshape(1, 1), loss_row)
    for k, v in enumerate(ent_losses):
        loss_row = jnp.where(lane == (num_levels + k), v.reshape(1, 1), loss_row)
    losses_ref[...] = loss_row


# ------------------------------ model (host glue) -----------------------------

def init_gcn_params(key, in_ch, hidden_ch, num_layers, out_ch):
    """PyG BasicGNN (GCN) conv stack shapes: in->hidden, hidden->hidden, hidden->out."""
    if num_layers == 1:
        dims = [(in_ch, out_ch)]
    else:
        dims = ([(in_ch, hidden_ch)]
                + [(hidden_ch, hidden_ch)] * (num_layers - 2)
                + [(hidden_ch, out_ch)])
    layers = []
    for fi, fo in dims:
        key, k1 = jax.random.split(key)
        w = jax.random.normal(k1, (fi, fo), jnp.float32) * (1.0 / np.sqrt(fi))
        b = jnp.zeros((1, fo), jnp.float32)   # kept 2-D for direct VMEM use
        layers.append((w, b))
    return layers, key


class DiffPoolPallas:
    # TODO(synk): only the batch=None (single graph) path of the reference
    # forward is implemented; general multi-graph batching with node masks is
    # not supported.
    def __init__(self, in_channels=16, max_num_nodes=32, *, num_pool_layers,
                 hidden_channels, num_layers, out_channels, out_channel_decay,
                 key):
        num_nodes = np.flip(
            np.geomspace(1, max_num_nodes, num_pool_layers + 1, dtype=int))[1:]
        self.num_pool_layers = num_pool_layers
        self.pool, self.embed = [], []
        hid, out = hidden_channels, out_channels
        last_out = out
        for num_node in num_nodes:
            p, key = init_gcn_params(key, in_channels, hid, num_layers, int(num_node))
            e, key = init_gcn_params(key, in_channels, hid, num_layers, out)
            self.pool.append(p)
            self.embed.append(e)
            last_out = out
            in_channels = ceil(out * out_channel_decay)
            hid = ceil(out * out_channel_decay)
            out = ceil(out * out_channel_decay)
        self.final_clusters = int(num_nodes[-1])
        self.final_features = last_out

        # Flatten parameters + static structure once (reused every call).
        self._flat_params = []
        struct = []
        for p_layers, e_layers in zip(self.pool, self.embed):
            struct.append((len(p_layers), len(e_layers)))
            for w, b in p_layers:
                self._flat_params += [w, b]
            for w, b in e_layers:
                self._flat_params += [w, b]
        self._struct = tuple(struct)

    def __call__(self, x, adj):
        kernel = functools.partial(_fused_forward_kernel, struct=self._struct)
        out_x, losses = pl.pallas_call(
            kernel,
            out_shape=(
                jax.ShapeDtypeStruct((self.final_clusters, self.final_features),
                                     jnp.float32),
                jax.ShapeDtypeStruct((1, 128), jnp.float32),
            ),
            in_specs=[_vmem()] * (2 + len(self._flat_params)),
            out_specs=(_vmem(), _vmem()),
        )(x, adj, *self._flat_params)

        L = self.num_pool_layers
        ls = [losses[0, k] for k in range(L)]
        es = [losses[0, L + k] for k in range(L)]
        # torch: [B=1, C_last, F].squeeze(1)
        if out_x.shape[0] == 1:
            x_final = out_x            # [1, F]
        else:
            x_final = out_x[None]      # [1, C_last, F]
        return x_final, ls, es


if __name__ == "__main__":
    key = jax.random.PRNGKey(0)
    kparam, kx = jax.random.split(key)

    N, IN_CH = 32, 16
    # out_channel_decay=1.0 keeps layer-to-layer feature dims consistent
    # (the reference module requires ceil(out*decay) == out for a valid forward).
    model = DiffPoolPallas(
        in_channels=IN_CH, max_num_nodes=32,
        num_pool_layers=2, hidden_channels=32, num_layers=2,
        out_channels=16, out_channel_decay=1.0, key=kparam)

    x = jax.random.normal(kx, (N, IN_CH), jnp.float32)

    # Deterministic undirected graph: ring + chord(+5), unique directed edges.
    edges = set()
    for i in range(N):
        for off in (1, 5):
            j = (i + off) % N
            edges.add((i, j))
            edges.add((j, i))
    edge_index = np.array(sorted(edges), dtype=np.int32).T  # [2, E]

    # to_dense_adj equivalent (glue): single graph, unweighted edge counts.
    adj = jnp.zeros((N, N), jnp.float32).at[edge_index[0], edge_index[1]].add(1.0)

    out_x, ls, es = model(x, adj)
    jax.block_until_ready((out_x, ls, es))
    assert out_x.shape == (1, 16)
    assert len(ls) == 2 and len(es) == 2
    print("KERNEL_OK")
</pallas_src>

<mosaic_0001>
module attributes {stable_mosaic.version = 11 : i64} {
  func.func @_fused_forward_kernel(%arg0: memref<32x16xf32, #tpu.memory_space<vmem>>, %arg1: memref<32x32xf32, #tpu.memory_space<vmem>>, %arg2: memref<16x32xf32, #tpu.memory_space<vmem>>, %arg3: memref<1x32xf32, #tpu.memory_space<vmem>>, %arg4: memref<32x5xf32, #tpu.memory_space<vmem>>, %arg5: memref<1x5xf32, #tpu.memory_space<vmem>>, %arg6: memref<16x32xf32, #tpu.memory_space<vmem>>, %arg7: memref<1x32xf32, #tpu.memory_space<vmem>>, %arg8: memref<32x16xf32, #tpu.memory_space<vmem>>, %arg9: memref<1x16xf32, #tpu.memory_space<vmem>>, %arg10: memref<16x16xf32, #tpu.memory_space<vmem>>, %arg11: memref<1x16xf32, #tpu.memory_space<vmem>>, %arg12: memref<16x1xf32, #tpu.memory_space<vmem>>, %arg13: memref<1x1xf32, #tpu.memory_space<vmem>>, %arg14: memref<16x16xf32, #tpu.memory_space<vmem>>, %arg15: memref<1x16xf32, #tpu.memory_space<vmem>>, %arg16: memref<16x16xf32, #tpu.memory_space<vmem>>, %arg17: memref<1x16xf32, #tpu.memory_space<vmem>>, %arg18: memref<1x16xf32, #tpu.memory_space<vmem>>, %arg19: memref<1x128xf32, #tpu.memory_space<vmem>>) attributes {dimension_semantics = [], scalar_prefetch = 0 : i64, scratch_operands = 0 : i64, tpu.core_type = #tpu.core_type<tc>} {
    %c0 = arith.constant 0 : index
    %c0_0 = arith.constant 0 : index
    %0 = vector.load %arg0[%c0, %c0_0] : memref<32x16xf32, #tpu.memory_space<vmem>>, vector<32x16xf32>
    %c0_1 = arith.constant 0 : index
    %c0_2 = arith.constant 0 : index
    %1 = vector.load %arg1[%c0_1, %c0_2] : memref<32x32xf32, #tpu.memory_space<vmem>>, vector<32x32xf32>
    %c0_3 = arith.constant 0 : index
    %c0_4 = arith.constant 0 : index
    %2 = vector.load %arg2[%c0_3, %c0_4] : memref<16x32xf32, #tpu.memory_space<vmem>>, vector<16x32xf32>
    %c0_5 = arith.constant 0 : index
    %c0_6 = arith.constant 0 : index
    %3 = vector.load %arg3[%c0_5, %c0_6] : memref<1x32xf32, #tpu.memory_space<vmem>>, vector<1x32xf32>
    %c0_7 = arith.constant 0 : index
    %c0_8 = arith.constant 0 : index
    %4 = vector.load %arg4[%c0_7, %c0_8] : memref<32x5xf32, #tpu.memory_space<vmem>>, vector<32x5xf32>
    %c0_9 = arith.constant 0 : index
    %c0_10 = arith.constant 0 : index
    %5 = vector.load %arg5[%c0_9, %c0_10] : memref<1x5xf32, #tpu.memory_space<vmem>>, vector<1x5xf32>
    %c0_11 = arith.constant 0 : index
    %c0_12 = arith.constant 0 : index
    %6 = vector.load %arg6[%c0_11, %c0_12] : memref<16x32xf32, #tpu.memory_space<vmem>>, vector<16x32xf32>
    %c0_13 = arith.constant 0 : index
    %c0_14 = arith.constant 0 : index
    %7 = vector.load %arg7[%c0_13, %c0_14] : memref<1x32xf32, #tpu.memory_space<vmem>>, vector<1x32xf32>
    %c0_15 = arith.constant 0 : index
    %c0_16 = arith.constant 0 : index
    %8 = vector.load %arg8[%c0_15, %c0_16] : memref<32x16xf32, #tpu.memory_space<vmem>>, vector<32x16xf32>
    %c0_17 = arith.constant 0 : index
    %c0_18 = arith.constant 0 : index
    %9 = vector.load %arg9[%c0_17, %c0_18] : memref<1x16xf32, #tpu.memory_space<vmem>>, vector<1x16xf32>
    %c0_19 = arith.constant 0 : index
    %c0_20 = arith.constant 0 : index
    %10 = vector.load %arg10[%c0_19, %c0_20] : memref<16x16xf32, #tpu.memory_space<vmem>>, vector<16x16xf32>
    %c0_21 = arith.constant 0 : index
    %c0_22 = arith.constant 0 : index
    %11 = vector.load %arg11[%c0_21, %c0_22] : memref<1x16xf32, #tpu.memory_space<vmem>>, vector<1x16xf32>
    %c0_23 = arith.constant 0 : index
    %c0_24 = arith.constant 0 : index
    %12 = vector.load %arg12[%c0_23, %c0_24] : memref<16x1xf32, #tpu.memory_space<vmem>>, vector<16x1xf32>
    %c0_25 = arith.constant 0 : index
    %c0_26 = arith.constant 0 : index
    %13 = vector.load %arg13[%c0_25, %c0_26] : memref<1x1xf32, #tpu.memory_space<vmem>>, vector<1x1xf32>
    %c0_27 = arith.constant 0 : index
    %c0_28 = arith.constant 0 : index
    %14 = vector.load %arg14[%c0_27, %c0_28] : memref<16x16xf32, #tpu.memory_space<vmem>>, vector<16x16xf32>
    %c0_29 = arith.constant 0 : index
    %c0_30 = arith.constant 0 : index
    %15 = vector.load %arg15[%c0_29, %c0_30] : memref<1x16xf32, #tpu.memory_space<vmem>>, vector<1x16xf32>
    %c0_31 = arith.constant 0 : index
    %c0_32 = arith.constant 0 : index
    %16 = vector.load %arg16[%c0_31, %c0_32] : memref<16x16xf32, #tpu.memory_space<vmem>>, vector<16x16xf32>
    %c0_33 = arith.constant 0 : index
    %c0_34 = arith.constant 0 : index
    %17 = vector.load %arg17[%c0_33, %c0_34] : memref<1x16xf32, #tpu.memory_space<vmem>>, vector<1x16xf32>
    %cst = arith.constant 0.000000e+00 : f32
    %18 = vector.broadcast %cst : f32 to vector<32x32xf32>
    %19 = arith.cmpf one, %1, %18 : vector<32x32xf32>
    %20 = arith.extui %19 : vector<32x32xi1> to vector<32x32xi32>
    %21 = arith.sitofp %20 : vector<32x32xi32> to vector<32x32xf32>
    %22 = tpu.iota {dimensions = array<i32: 0>} : vector<32x32xi32>
    %23 = tpu.iota {dimensions = array<i32: 1>} : vector<32x32xi32>
    %24 = arith.cmpi eq, %22, %23 : vector<32x32xi32>
    %25 = arith.extui %24 : vector<32x32xi1> to vector<32x32xi32>
    %26 = arith.sitofp %25 : vector<32x32xi32> to vector<32x32xf32>
    %27 = arith.maximumf %21, %26 : vector<32x32xf32>
    %cst_35 = arith.constant dense<0.000000e+00> : vector<32xf32>
    %28 = vector.multi_reduction <add>, %27, %cst_35 [1] : vector<32x32xf32> to vector<32xf32>
    %29 = vector.shape_cast %28 : vector<32xf32> to vector<32x1xf32>
    %cst_36 = arith.constant dense<0.000000e+00> : vector<32xf32>
    %30 = vector.multi_reduction <add>, %27, %cst_36 [0] : vector<32x32xf32> to vector<32xf32>
    %31 = vector.shape_cast %30 : vector<32xf32> to vector<1x32xf32>
    %32 = math.rsqrt %29 : vector<32x1xf32>
    %33 = vector.broadcast %32 : vector<32x1xf32> to vector<32x32xf32>
    %34 = arith.mulf %33, %27 : vector<32x32xf32>
    %35 = math.rsqrt %31 : vector<1x32xf32>
    %36 = vector.broadcast %35 : vector<1x32xf32> to vector<32x32xf32>
    %37 = arith.mulf %34, %36 : vector<32x32xf32>
    %cst_37 = arith.constant dense<0.000000e+00> : vector<32x32xf32>
    %38 = tpu.matmul %0, %2, %cst_37 {dimension_numbers = #tpu.dot_dimension_numbers<[1], [0], [0], [1], [0, 0, 1, 1], [], []>} : vector<32x16xf32>, vector<16x32xf32>, vector<32x32xf32> -> vector<32x32xf32>
    %cst_38 = arith.constant dense<0.000000e+00> : vector<32x32xf32>
    %39 = tpu.matmul %37, %38, %cst_38 {dimension_numbers = #tpu.dot_dimension_numbers<[1], [0], [0], [1], [0, 0, 1, 1], [], []>} : vector<32x32xf32>, vector<32x32xf32>, vector<32x32xf32> -> vector<32x32xf32>
    %40 = vector.broadcast %3 : vector<1x32xf32> to vector<32x32xf32>
    %41 = arith.addf %39, %40 : vector<32x32xf32>
    %cst_39 = arith.constant 0.000000e+00 : f32
    %42 = vector.broadcast %cst_39 : f32 to vector<32x32xf32>
    %43 = arith.maximumf %41, %42 : vector<32x32xf32>
    %cst_40 = arith.constant dense<0.000000e+00> : vector<32x5xf32>
    %44 = tpu.matmul %43, %4, %cst_40 {dimension_numbers = #tpu.dot_dimension_numbers<[1], [0], [0], [1], [0, 0, 1, 1], [], []>} : vector<32x32xf32>, vector<32x5xf32>, vector<32x5xf32> -> vector<32x5xf32>
    %cst_41 = arith.constant dense<0.000000e+00> : vector<32x5xf32>
    %45 = tpu.matmul %37, %44, %cst_41 {dimension_numbers = #tpu.dot_dimension_numbers<[1], [0], [0], [1], [0, 0, 1, 1], [], []>} : vector<32x32xf32>, vector<32x5xf32>, vector<32x5xf32> -> vector<32x5xf32>
    %46 = vector.broadcast %5 : vector<1x5xf32> to vector<32x5xf32>
    %47 = arith.addf %45, %46 : vector<32x5xf32>
    %cst_42 = arith.constant dense<0.000000e+00> : vector<32x32xf32>
    %48 = tpu.matmul %0, %6, %cst_42 {dimension_numbers = #tpu.dot_dimension_numbers<[1], [0], [0], [1], [0, 0, 1, 1], [], []>} : vector<32x16xf32>, vector<16x32xf32>, vector<32x32xf32> -> vector<32x32xf32>
    %cst_43 = arith.constant dense<0.000000e+00> : vector<32x32xf32>
    %49 = tpu.matmul %37, %48, %cst_43 {dimension_numbers = #tpu.dot_dimension_numbers<[1], [0], [0], [1], [0, 0, 1, 1], [], []>} : vector<32x32xf32>, vector<32x32xf32>, vector<32x32xf32> -> vector<32x32xf32>
    %50 = vector.broadcast %7 : vector<1x32xf32> to vector<32x32xf32>
    %51 = arith.addf %49, %50 : vector<32x32xf32>
    %cst_44 = arith.constant 0.000000e+00 : f32
    %52 = vector.broadcast %cst_44 : f32 to vector<32x32xf32>
    %53 = arith.maximumf %51, %52 : vector<32x32xf32>
    %cst_45 = arith.constant dense<0.000000e+00> : vector<32x16xf32>
    %54 = tpu.matmul %53, %8, %cst_45 {dimension_numbers = #tpu.dot_dimension_numbers<[1], [0], [0], [1], [0, 0, 1, 1], [], []>} : vector<32x32xf32>, vector<32x16xf32>, vector<32x16xf32> -> vector<32x16xf32>
    %cst_46 = arith.constant dense<0.000000e+00> : vector<32x16xf32>
    %55 = tpu.matmul %37, %54, %cst_46 {dimension_numbers = #tpu.dot_dimension_numbers<[1], [0], [0], [1], [0, 0, 1, 1], [], []>} : vector<32x32xf32>, vector<32x16xf32>, vector<32x16xf32> -> vector<32x16xf32>
    %56 = vector.broadcast %9 : vector<1x16xf32> to vector<32x16xf32>
    %57 = arith.addf %55, %56 : vector<32x16xf32>
    %cst_47 = arith.constant dense<0xFF800000> : vector<32xf32>
    %58 = vector.multi_reduction <maximumf>, %47, %cst_47 [1] : vector<32x5xf32> to vector<32xf32>
    %59 = vector.shape_cast %58 : vector<32xf32> to vector<32x1xf32>
    %60 = vector.broadcast %59 : vector<32x1xf32> to vector<32x5xf32>
    %61 = arith.subf %47, %60 : vector<32x5xf32>
    %62 = math.exp %61 : vector<32x5xf32>
    %cst_48 = arith.constant dense<0.000000e+00> : vector<32xf32>
    %63 = vector.multi_reduction <add>, %62, %cst_48 [1] : vector<32x5xf32> to vector<32xf32>
    %64 = vector.shape_cast %63 : vector<32xf32> to vector<32x1xf32>
    %65 = vector.broadcast %64 : vector<32x1xf32> to vector<32x5xf32>
    %66 = arith.divf %62, %65 : vector<32x5xf32>
    %67 = tpu.transpose %66, [1, 0] : vector<32x5xf32> -> vector<5x32xf32>
    %cst_49 = arith.constant dense<0.000000e+00> : vector<5x16xf32>
    %68 = tpu.matmul %67, %57, %cst_49 {dimension_numbers = #tpu.dot_dimension_numbers<[1], [0], [0], [1], [0, 0, 1, 1], [], []>} : vector<5x32xf32>, vector<32x16xf32>, vector<5x16xf32> -> vector<5x16xf32>
    %cst_50 = arith.constant dense<0.000000e+00> : vector<5x32xf32>
    %69 = tpu.matmul %67, %1, %cst_50 {dimension_numbers = #tpu.dot_dimension_numbers<[1], [0], [0], [1], [0, 0, 1, 1], [], []>} : vector<5x32xf32>, vector<32x32xf32>, vector<5x32xf32> -> vector<5x32xf32>
    %cst_51 = arith.constant dense<0.000000e+00> : vector<5x5xf32>
    %70 = tpu.matmul %69, %66, %cst_51 {dimension_numbers = #tpu.dot_dimension_numbers<[1], [0], [0], [1], [0, 0, 1, 1], [], []>} : vector<5x32xf32>, vector<32x5xf32>, vector<5x5xf32> -> vector<5x5xf32>
    %cst_52 = arith.constant dense<0.000000e+00> : vector<32x32xf32>
    %71 = tpu.matmul %66, %67, %cst_52 {dimension_numbers = #tpu.dot_dimension_numbers<[1], [0], [0], [1], [0, 0, 1, 1], [], []>} : vector<32x5xf32>, vector<5x32xf32>, vector<32x32xf32> -> vector<32x32xf32>
    %72 = arith.subf %1, %71 : vector<32x32xf32>
    %73 = arith.mulf %72, %72 : vector<32x32xf32>
    %74 = vector.shape_cast %73 : vector<32x32xf32> to vector<1x32x32xf32>
    %cst_53 = arith.constant dense<0.000000e+00> : vector<1xf32>
    %75 = vector.multi_reduction <add>, %74, %cst_53 [1, 2] : vector<1x32x32xf32> to vector<1xf32>
    %76 = vector.shape_cast %75 : vector<1xf32> to vector<1x1x1xf32>
    %77 = vector.extract %76[0, 0, 0] : f32 from vector<1x1x1xf32>
    %78 = math.sqrt %77 : f32
    %cst_54 = arith.constant 1.024000e+03 : f32
    %79 = arith.divf %78, %cst_54 : f32
    %cst_55 = arith.constant 0.000000e+00 : f32
    %80 = vector.broadcast %cst_55 : f32 to vector<32x5xf32>
    %81 = arith.subf %80, %66 : vector<32x5xf32>
    %cst_56 = arith.constant 1.000000e-15 : f32
    %82 = vector.broadcast %cst_56 : f32 to vector<32x5xf32>
    %83 = arith.addf %66, %82 : vector<32x5xf32>
    %84 = math.log %83 : vector<32x5xf32>
    %85 = arith.mulf %81, %84 : vector<32x5xf32>
    %86 = vector.shape_cast %85 : vector<32x5xf32> to vector<1x32x5xf32>
    %cst_57 = arith.constant dense<0.000000e+00> : vector<1xf32>
    %87 = vector.multi_reduction <add>, %86, %cst_57 [1, 2] : vector<1x32x5xf32> to vector<1xf32>
    %88 = vector.shape_cast %87 : vector<1xf32> to vector<1x1x1xf32>
    %89 = vector.extract %88[0, 0, 0] : f32 from vector<1x1x1xf32>
    %cst_58 = arith.constant 3.200000e+01 : f32
    %90 = arith.divf %89, %cst_58 : f32
    %cst_59 = arith.constant 0.000000e+00 : f32
    %91 = vector.broadcast %cst_59 : f32 to vector<5x5xf32>
    %92 = arith.cmpf one, %70, %91 : vector<5x5xf32>
    %93 = arith.extui %92 : vector<5x5xi1> to vector<5x5xi32>
    %94 = arith.sitofp %93 : vector<5x5xi32> to vector<5x5xf32>
    %cst_60 = arith.constant 0.000000e+00 : f32
    %95 = vector.broadcast %cst_60 : f32 to vector<5x5xf32>
    %96 = arith.cmpf one, %94, %95 : vector<5x5xf32>
    %97 = arith.extui %96 : vector<5x5xi1> to vector<5x5xi32>
    %98 = arith.sitofp %97 : vector<5x5xi32> to vector<5x5xf32>
    %99 = tpu.iota {dimensions = array<i32: 0>} : vector<5x5xi32>
    %100 = tpu.iota {dimensions = array<i32: 1>} : vector<5x5xi32>
    %101 = arith.cmpi eq, %99, %100 : vector<5x5xi32>
    %102 = arith.extui %101 : vector<5x5xi1> to vector<5x5xi32>
    %103 = arith.sitofp %102 : vector<5x5xi32> to vector<5x5xf32>
    %104 = arith.maximumf %98, %103 : vector<5x5xf32>
    %cst_61 = arith.constant dense<0.000000e+00> : vector<5xf32>
    %105 = vector.multi_reduction <add>, %104, %cst_61 [1] : vector<5x5xf32> to vector<5xf32>
    %106 = vector.shape_cast %105 : vector<5xf32> to vector<5x1xf32>
    %cst_62 = arith.constant dense<0.000000e+00> : vector<5xf32>
    %107 = vector.multi_reduction <add>, %104, %cst_62 [0] : vector<5x5xf32> to vector<5xf32>
    %108 = vector.shape_cast %107 : vector<5xf32> to vector<1x5xf32>
    %109 = math.rsqrt %106 : vector<5x1xf32>
    %110 = vector.broadcast %109 : vector<5x1xf32> to vector<5x5xf32>
    %111 = arith.mulf %110, %104 : vector<5x5xf32>
    %112 = math.rsqrt %108 : vector<1x5xf32>
    %113 = vector.broadcast %112 : vector<1x5xf32> to vector<5x5xf32>
    %114 = arith.mulf %111, %113 : vector<5x5xf32>
    %cst_63 = arith.constant dense<0.000000e+00> : vector<5x16xf32>
    %115 = tpu.matmul %68, %10, %cst_63 {dimension_numbers = #tpu.dot_dimension_numbers<[1], [0], [0], [1], [0, 0, 1, 1], [], []>} : vector<5x16xf32>, vector<16x16xf32>, vector<5x16xf32> -> vector<5x16xf32>
    %cst_64 = arith.constant dense<0.000000e+00> : vector<5x16xf32>
    %116 = tpu.matmul %114, %115, %cst_64 {dimension_numbers = #tpu.dot_dimension_numbers<[1], [0], [0], [1], [0, 0, 1, 1], [], []>} : vector<5x5xf32>, vector<5x16xf32>, vector<5x16xf32> -> vector<5x16xf32>
    %117 = vector.broadcast %11 : vector<1x16xf32> to vector<5x16xf32>
    %118 = arith.addf %116, %117 : vector<5x16xf32>
    %cst_65 = arith.constant 0.000000e+00 : f32
    %119 = vector.broadcast %cst_65 : f32 to vector<5x16xf32>
    %120 = arith.maximumf %118, %119 : vector<5x16xf32>
    %cst_66 = arith.constant dense<0.000000e+00> : vector<5x1xf32>
    %121 = tpu.matmul %120, %12, %cst_66 {dimension_numbers = #tpu.dot_dimension_numbers<[1], [0], [0], [1], [0, 0, 1, 1], [], []>} : vector<5x16xf32>, vector<16x1xf32>, vector<5x1xf32> -> vector<5x1xf32>
    %cst_67 = arith.constant dense<0.000000e+00> : vector<5x1xf32>
    %122 = tpu.matmul %114, %121, %cst_67 {dimension_numbers = #tpu.dot_dimension_numbers<[1], [0], [0], [1], [0, 0, 1, 1], [], []>} : vector<5x5xf32>, vector<5x1xf32>, vector<5x1xf32> -> vector<5x1xf32>
    %123 = vector.broadcast %13 : vector<1x1xf32> to vector<5x1xf32>
    %124 = arith.addf %122, %123 : vector<5x1xf32>
    %cst_68 = arith.constant dense<0.000000e+00> : vector<5x16xf32>
    %125 = tpu.matmul %68, %14, %cst_68 {dimension_numbers = #tpu.dot_dimension_numbers<[1], [0], [0], [1], [0, 0, 1, 1], [], []>} : vector<5x16xf32>, vector<16x16xf32>, vector<5x16xf32> -> vector<5x16xf32>
    %cst_69 = arith.constant dense<0.000000e+00> : vector<5x16xf32>
    %126 = tpu.matmul %114, %125, %cst_69 {dimension_numbers = #tpu.dot_dimension_numbers<[1], [0], [0], [1], [0, 0, 1, 1], [], []>} : vector<5x5xf32>, vector<5x16xf32>, vector<5x16xf32> -> vector<5x16xf32>
    %127 = vector.broadcast %15 : vector<1x16xf32> to vector<5x16xf32>
    %128 = arith.addf %126, %127 : vector<5x16xf32>
    %cst_70 = arith.constant 0.000000e+00 : f32
    %129 = vector.broadcast %cst_70 : f32 to vector<5x16xf32>
    %130 = arith.maximumf %128, %129 : vector<5x16xf32>
    %cst_71 = arith.constant dense<0.000000e+00> : vector<5x16xf32>
    %131 = tpu.matmul %130, %16, %cst_71 {dimension_numbers = #tpu.dot_dimension_numbers<[1], [0], [0], [1], [0, 0, 1, 1], [], []>} : vector<5x16xf32>, vector<16x16xf32>, vector<5x16xf32> -> vector<5x16xf32>
    %cst_72 = arith.constant dense<0.000000e+00> : vector<5x16xf32>
    %132 = tpu.matmul %114, %131, %cst_72 {dimension_numbers = #tpu.dot_dimension_numbers<[1], [0], [0], [1], [0, 0, 1, 1], [], []>} : vector<5x5xf32>, vector<5x16xf32>, vector<5x16xf32> -> vector<5x16xf32>
    %133 = vector.broadcast %17 : vector<1x16xf32> to vector<5x16xf32>
    %134 = arith.addf %132, %133 : vector<5x16xf32>
    %cst_73 = arith.constant dense<0xFF800000> : vector<5xf32>
    %135 = vector.multi_reduction <maximumf>, %124, %cst_73 [1] : vector<5x1xf32> to vector<5xf32>
    %136 = vector.shape_cast %135 : vector<5xf32> to vector<5x1xf32>
    %137 = arith.subf %124, %136 : vector<5x1xf32>
    %138 = math.exp %137 : vector<5x1xf32>
    %cst_74 = arith.constant dense<0.000000e+00> : vector<5xf32>
    %139 = vector.multi_reduction <add>, %138, %cst_74 [1] : vector<5x1xf32> to vector<5xf32>
    %140 = vector.shape_cast %139 : vector<5xf32> to vector<5x1xf32>
    %141 = arith.divf %138, %140 : vector<5x1xf32>
    %142 = tpu.transpose %141, [1, 0] : vector<5x1xf32> -> vector<1x5xf32>
    %cst_75 = arith.constant dense<0.000000e+00> : vector<1x16xf32>
    %143 = tpu.matmul %142, %134, %cst_75 {dimension_numbers = #tpu.dot_dimension_numbers<[1], [0], [0], [1], [0, 0, 1, 1], [], []>} : vector<1x5xf32>, vector<5x16xf32>, vector<1x16xf32> -> vector<1x16xf32>
    %cst_76 = arith.constant dense<0.000000e+00> : vector<5x5xf32>
    %144 = tpu.matmul %141, %142, %cst_76 {dimension_numbers = #tpu.dot_dimension_numbers<[1], [0], [0], [1], [0, 0, 1, 1], [], []>} : vector<5x1xf32>, vector<1x5xf32>, vector<5x5xf32> -> vector<5x5xf32>
    %145 = arith.subf %94, %144 : vector<5x5xf32>
    %146 = arith.mulf %145, %145 : vector<5x5xf32>
    %147 = vector.shape_cast %146 : vector<5x5xf32> to vector<1x5x5xf32>
    %cst_77 = arith.constant dense<0.000000e+00> : vector<1xf32>
    %148 = vector.multi_reduction <add>, %147, %cst_77 [1, 2] : vector<1x5x5xf32> to vector<1xf32>
    %149 = vector.shape_cast %148 : vector<1xf32> to vector<1x1x1xf32>
    %150 = vector.extract %149[0, 0, 0] : f32 from vector<1x1x1xf32>
    %151 = math.sqrt %150 : f32
    %cst_78 = arith.constant 2.500000e+01 : f32
    %152 = arith.divf %151, %cst_78 : f32
    %cst_79 = arith.constant 0.000000e+00 : f32
    %153 = vector.broadcast %cst_79 : f32 to vector<5x1xf32>
    %154 = arith.subf %153, %141 : vector<5x1xf32>
    %cst_80 = arith.constant 1.000000e-15 : f32
    %155 = vector.broadcast %cst_80 : f32 to vector<5x1xf32>
    %156 = arith.addf %141, %155 : vector<5x1xf32>
    %157 = math.log %156 : vector<5x1xf32>
    %158 = arith.mulf %154, %157 : vector<5x1xf32>
    %159 = vector.shape_cast %158 : vector<5x1xf32> to vector<1x5x1xf32>
    %cst_81 = arith.constant dense<0.000000e+00> : vector<1xf32>
    %160 = vector.multi_reduction <add>, %159, %cst_81 [1, 2] : vector<1x5x1xf32> to vector<1xf32>
    %161 = vector.shape_cast %160 : vector<1xf32> to vector<1x1x1xf32>
    %162 = vector.extract %161[0, 0, 0] : f32 from vector<1x1x1xf32>
    %cst_82 = arith.constant 5.000000e+00 : f32
    %163 = arith.divf %162, %cst_82 : f32
    %c0_83 = arith.constant 0 : index
    %c0_84 = arith.constant 0 : index
    %164 = vector.load %arg18[%c0_83, %c0_84] : memref<1x16xf32, #tpu.memory_space<vmem>>, vector<1x16xf32>
    tpu.vector_store %arg18[%c0_83, %c0_84], %143 {strides = array<i32>} : memref<1x16xf32, #tpu.memory_space<vmem>>, vector<1x16xf32>,
    %165 = tpu.iota {dimensions = array<i32: 1>} : vector<1x128xi32>
    %cst_85 = arith.constant 0.000000e+00 : f32
    %166 = vector.broadcast %cst_85 : f32 to vector<1x128xf32>
    %c0_i32 = arith.constant 0 : i32
    %167 = vector.broadcast %c0_i32 : i32 to vector<1x128xi32>
    %168 = arith.cmpi eq, %165, %167 : vector<1x128xi32>
    %169 = vector.broadcast %79 : f32 to vector<1x1xf32>
    %170 = vector.shape_cast %169 : vector<1x1xf32> to vector<1x1xf32>
    %171 = vector.broadcast %170 : vector<1x1xf32> to vector<1x128xf32>
    %172 = arith.select %168, %171, %166 : vector<1x128xi1>, vector<1x128xf32>
    %c1_i32 = arith.constant 1 : i32
    %173 = vector.broadcast %c1_i32 : i32 to vector<1x128xi32>
    %174 = arith.cmpi eq, %165, %173 : vector<1x128xi32>
    %175 = vector.broadcast %152 : f32 to vector<1x1xf32>
    %176 = vector.shape_cast %175 : vector<1x1xf32> to vector<1x1xf32>
    %177 = vector.broadcast %176 : vector<1x1xf32> to vector<1x128xf32>
    %178 = arith.select %174, %177, %172 : vector<1x128xi1>, vector<1x128xf32>
    %c2_i32 = arith.constant 2 : i32
    %179 = vector.broadcast %c2_i32 : i32 to vector<1x128xi32>
    %180 = arith.cmpi eq, %165, %179 : vector<1x128xi32>
    %181 = vector.broadcast %90 : f32 to vector<1x1xf32>
    %182 = vector.shape_cast %181 : vector<1x1xf32> to vector<1x1xf32>
    %183 = vector.broadcast %182 : vector<1x1xf32> to vector<1x128xf32>
    %184 = arith.select %180, %183, %178 : vector<1x128xi1>, vector<1x128xf32>
    %c3_i32 = arith.constant 3 : i32
    %185 = vector.broadcast %c3_i32 : i32 to vector<1x128xi32>
    %186 = arith.cmpi eq, %165, %185 : vector<1x128xi32>
    %187 = vector.broadcast %163 : f32 to vector<1x1xf32>
    %188 = vector.shape_cast %187 : vector<1x1xf32> to vector<1x1xf32>
    %189 = vector.broadcast %188 : vector<1x1xf32> to vector<1x128xf32>
    %190 = arith.select %186, %189, %184 : vector<1x128xi1>, vector<1x128xf32>
    %c0_86 = arith.constant 0 : index
    %c0_87 = arith.constant 0 : index
    %191 = vector.load %arg19[%c0_86, %c0_87] : memref<1x128xf32, #tpu.memory_space<vmem>>, vector<1x128xf32>
    tpu.vector_store %arg19[%c0_86, %c0_87], %190 {strides = array<i32>} : memref<1x128xf32, #tpu.memory_space<vmem>>, vector<1x128xf32>,
    return
  }
}

</mosaic_0001>

<llo_original>
// kernel: tpu_custom_call.1
$region0: #{tpu_custom_call.1}
  #allocation0 [shape = 'u32[]', space=smem, size = 0x4, offset = 0x4, fixed_abs, tag = 'smem constant byte address 0x4 - core index']
  #allocation1 [shape = 'u32[72,128]{1,0:T(1,128)}', space=vmem, size = 0x9000, scoped, tag = 'internal scratch']
  #allocation2 [shape = 'f32[1,1]{1,0:T(1,128)S(1)}', space=vmem, size = 0x200, scoped, tag = 'scoped memory for tpu_custom_call.1']
  %s0 = inlined_call_operand.vmem [shape: f32[32,16], index: 0, kind: input, shape index: {}]
  %s1 = inlined_call_operand.vmem [shape: f32[32,32], index: 1, kind: input, shape index: {}]
  %s2 = inlined_call_operand.vmem [shape: f32[16,32], index: 2, kind: input, shape index: {}]
  %s3 = inlined_call_operand.vmem [shape: f32[1,32], index: 3, kind: input, shape index: {}]
  %s4 = inlined_call_operand.vmem [shape: f32[32,5], index: 4, kind: input, shape index: {}]
  %s5 = inlined_call_operand.vmem [shape: f32[1,5], index: 5, kind: input, shape index: {}]
  %s6 = inlined_call_operand.vmem [shape: f32[16,32], index: 6, kind: input, shape index: {}]
  %s7 = inlined_call_operand.vmem [shape: f32[1,32], index: 7, kind: input, shape index: {}]
  %s8 = inlined_call_operand.vmem [shape: f32[32,16], index: 8, kind: input, shape index: {}]
  %s9 = inlined_call_operand.vmem [shape: f32[1,16], index: 9, kind: input, shape index: {}]
  %s10 = inlined_call_operand.vmem [shape: f32[16,16], index: 10, kind: input, shape index: {}]
  %s11 = inlined_call_operand.vmem [shape: f32[1,16], index: 11, kind: input, shape index: {}]
  %s12 = inlined_call_operand.vmem [shape: f32[16,1], index: 12, kind: input, shape index: {}]
  %s13 = inlined_call_operand.<no memory space> [shape: f32[1,1], index: 13, kind: input, shape index: {}]
  %s14 = inlined_call_operand.vmem [shape: f32[16,16], index: 14, kind: input, shape index: {}]
  %s15 = inlined_call_operand.vmem [shape: f32[1,16], index: 15, kind: input, shape index: {}]
  %s16 = inlined_call_operand.vmem [shape: f32[16,16], index: 16, kind: input, shape index: {}]
  %s17 = inlined_call_operand.vmem [shape: f32[1,16], index: 17, kind: input, shape index: {}]
  %s18 = inlined_call_operand.hbm [shape: f32[1,16], index: 18, kind: output, shape index: {0}]
  %s19 = inlined_call_operand.hbm [shape: f32[1,128], index: 19, kind: output, shape index: {1}]
  %20 = xla_tuple %s18, %s19
  %s21 = sld [smem:[#allocation0]]
  $region90: #{tpu_custom_call.1} parent=0
    _
  %s23 = ssub.s32 1, %s21
  %s24 = scalar_select 0, %s23, %s21
  %v25 = vstv %s13
  %26 = vst [vmem:[#allocation2] sm:$0x1] %v25
  $region1: #{tpu_custom_call.1} parent=0
    #allocation3 [shape = 'u8[512]{0}', space=vmem, size = 0x400, scoped, tag = 'output window, operand 0, single buffered']
    #allocation4 [shape = 's32[1]{0}', space=sflag, size = 0x4, scoped, tag = 'scoped memory for tpu_custom_call.1']
    #allocation5 [shape = 'u8[512]{0}', space=vmem, size = 0x400, scoped, tag = 'output window, operand 1, single buffered']
    #allocation6 [shape = 's32[1]{0}', space=sflag, size = 0x4, scoped, tag = 'scoped memory for tpu_custom_call.1']
    %27 = vsyncpa [#allocation4], 0
    %28 = vsyncpa [#allocation6], 0
    // Predicated region
    $region2: #{tpu_custom_call.1} parent=1 // pred_check
      _
    $region3: #{tpu_custom_call.1} parent=1 // pred_check_branch
      %30 = sbr.rel (0) target = $region5
    $region4: #{tpu_custom_call.1} parent=1 // pred_region
      _
    $region5: #{tpu_custom_call.1} parent=1 // pred_fallthru
      _
    // Predicated region
    $region6: #{tpu_custom_call.1} parent=1 // pred_check
      _
    $region7: #{tpu_custom_call.1} parent=1 // pred_check_branch
      %32 = sbr.rel (0) target = $region9
    $region8: #{tpu_custom_call.1} parent=1 // pred_region
      _
    $region9: #{tpu_custom_call.1} parent=1 // pred_fallthru
      _
    // Predicated region
    $region10: #{tpu_custom_call.1} parent=1 // pred_check
      _
    $region11: #{tpu_custom_call.1} parent=1 // pred_check_branch
      %34 = sbr.rel (0) target = $region13
    $region12: #{tpu_custom_call.1} parent=1 // pred_region
      _
    $region13: #{tpu_custom_call.1} parent=1 // pred_fallthru
      _
    // Predicated region
    $region14: #{tpu_custom_call.1} parent=1 // pred_check
      _
    $region15: #{tpu_custom_call.1} parent=1 // pred_check_branch
      %36 = sbr.rel (0) target = $region17
    $region16: #{tpu_custom_call.1} parent=1 // pred_region
      _
    $region17: #{tpu_custom_call.1} parent=1 // pred_fallthru
      _
    // Predicated region
    $region18: #{tpu_custom_call.1} parent=1 // pred_check
      _
    $region19: #{tpu_custom_call.1} parent=1 // pred_check_branch
      %38 = sbr.rel (0) target = $region21
    $region20: #{tpu_custom_call.1} parent=1 // pred_region
      _
    $region21: #{tpu_custom_call.1} parent=1 // pred_fallthru
      _
    // Predicated region
    $region22: #{tpu_custom_call.1} parent=1 // pred_check
      _
    $region23: #{tpu_custom_call.1} parent=1 // pred_check_branch
      %40 = sbr.rel (0) target = $region25
    $region24: #{tpu_custom_call.1} parent=1 // pred_region
      _
    $region25: #{tpu_custom_call.1} parent=1 // pred_fallthru
      _
    // Predicated region
    $region26: #{tpu_custom_call.1} parent=1 // pred_check
      _
    $region27: #{tpu_custom_call.1} parent=1 // pred_check_branch
      %42 = sbr.rel (0) target = $region29
    $region28: #{tpu_custom_call.1} parent=1 // pred_region
      _
    $region29: #{tpu_custom_call.1} parent=1 // pred_fallthru
      _
    // Predicated region
    $region30: #{tpu_custom_call.1} parent=1 // pred_check
      _
    $region31: #{tpu_custom_call.1} parent=1 // pred_check_branch
      %44 = sbr.rel (0) target = $region33
    $region32: #{tpu_custom_call.1} parent=1 // pred_region
      _
    $region33: #{tpu_custom_call.1} parent=1 // pred_fallthru
      _
    // Predicated region
    $region34: #{tpu_custom_call.1} parent=1 // pred_check
      _
    $region35: #{tpu_custom_call.1} parent=1 // pred_check_branch
      %46 = sbr.rel (0) target = $region37
    $region36: #{tpu_custom_call.1} parent=1 // pred_region
      _
    $region37: #{tpu_custom_call.1} parent=1 // pred_fallthru
      _
    // Predicated region
    $region38: #{tpu_custom_call.1} parent=1 // pred_check
      _
    $region39: #{tpu_custom_call.1} parent=1 // pred_check_branch
      %48 = sbr.rel (0) target = $region41
    $region40: #{tpu_custom_call.1} parent=1 // pred_region
      _
    $region41: #{tpu_custom_call.1} parent=1 // pred_fallthru
      _
    // Predicated region
    $region42: #{tpu_custom_call.1} parent=1 // pred_check
      _
    $region43: #{tpu_custom_call.1} parent=1 // pred_check_branch
      %50 = sbr.rel (0) target = $region45
    $region44: #{tpu_custom_call.1} parent=1 // pred_region
      _
    $region45: #{tpu_custom_call.1} parent=1 // pred_fallthru
      _
    // Predicated region
    $region46: #{tpu_custom_call.1} parent=1 // pred_check
      _
    $region47: #{tpu_custom_call.1} parent=1 // pred_check_branch
      %52 = sbr.rel (0) target = $region49
    $region48: #{tpu_custom_call.1} parent=1 // pred_region
      _
    $region49: #{tpu_custom_call.1} parent=1 // pred_fallthru
      _
    // Predicated region
    $region50: #{tpu_custom_call.1} parent=1 // pred_check
      _
    $region51: #{tpu_custom_call.1} parent=1 // pred_check_branch
      %54 = sbr.rel (0) target = $region53
    $region52: #{tpu_custom_call.1} parent=1 // pred_region
      _
    $region53: #{tpu_custom_call.1} parent=1 // pred_fallthru
      _
    // Predicated region
    $region54: #{tpu_custom_call.1} parent=1 // pred_check
      _
    $region55: #{tpu_custom_call.1} parent=1 // pred_check_branch
      %56 = sbr.rel (0) target = $region57
    $region56: #{tpu_custom_call.1} parent=1 // pred_region
      _
    $region57: #{tpu_custom_call.1} parent=1 // pred_fallthru
      _
    // Predicated region
    $region58: #{tpu_custom_call.1} parent=1 // pred_check
      _
    $region59: #{tpu_custom_call.1} parent=1 // pred_check_branch
      %58 = sbr.rel (0) target = $region61
    $region60: #{tpu_custom_call.1} parent=1 // pred_region
      _
    $region61: #{tpu_custom_call.1} parent=1 // pred_fallthru
      _
    // Predicated region
    $region62: #{tpu_custom_call.1} parent=1 // pred_check
      _
    $region63: #{tpu_custom_call.1} parent=1 // pred_check_branch
      %60 = sbr.rel (0) target = $region65
    $region64: #{tpu_custom_call.1} parent=1 // pred_region
      _
    $region65: #{tpu_custom_call.1} parent=1 // pred_fallthru
      _
    // Predicated region
    $region66: #{tpu_custom_call.1} parent=1 // pred_check
      _
    $region67: #{tpu_custom_call.1} parent=1 // pred_check_branch
      %62 = sbr.rel (0) target = $region69
    $region68: #{tpu_custom_call.1} parent=1 // pred_region
      _
    $region69: #{tpu_custom_call.1} parent=1 // pred_fallthru
      _
    // Predicated region
    $region70: #{tpu_custom_call.1} parent=1 // pred_check
      _
    $region71: #{tpu_custom_call.1} parent=1 // pred_check_branch
      %64 = sbr.rel (0) target = $region73
    $region72: #{tpu_custom_call.1} parent=1 // pred_region
      _
    $region73: #{tpu_custom_call.1} parent=1 // pred_fallthru
      _
    %v65 = vld [vmem:[%s0] sm:$0xff]
    %v66 = vld [vmem:[%s0 + $0x8] sm:$0xff]
    %v67 = vld [vmem:[%s0 + $0x10] sm:$0xff]
    %v68 = vld [vmem:[%s0 + $0x18] sm:$0xff]
    %v69 = vld [vmem:[%s1] sm:$0xff]
    %v70 = vld [vmem:[%s1 + $0x8] sm:$0xff]
    %v71 = vld [vmem:[%s1 + $0x10] sm:$0xff]
    %v72 = vld [vmem:[%s1 + $0x18] sm:$0xff]
    %v73 = vld [vmem:[%s2] sm:$0xff]
    %v74 = vld [vmem:[%s2 + $0x8] sm:$0xff]
    %v75 = vld [vmem:[%s3] sm:$0x1]
    %v76 = vld [vmem:[%s4] sm:$0xff]
    %v77 = vld [vmem:[%s4 + $0x8] sm:$0xff]
    %v78 = vld [vmem:[%s4 + $0x10] sm:$0xff]
    %v79 = vld [vmem:[%s4 + $0x18] sm:$0xff]
    %v80 = vld [vmem:[%s5] sm:$0x1]
    %v81 = vld [vmem:[%s6] sm:$0xff]
    %v82 = vld [vmem:[%s6 + $0x8] sm:$0xff]
    %v83 = vld [vmem:[%s7] sm:$0x1]
    %v84 = vld [vmem:[%s8] sm:$0xff]
    %v85 = vld [vmem:[%s8 + $0x8] sm:$0xff]
    %v86 = vld [vmem:[%s8 + $0x10] sm:$0xff]
    %v87 = vld [vmem:[%s8 + $0x18] sm:$0xff]
    %v88 = vld [vmem:[%s9] sm:$0x1]
    %v89 = vld [vmem:[%s10] sm:$0xff]
    %v90 = vld [vmem:[%s10 + $0x8] sm:$0xff]
    %v91 = vld [vmem:[%s11] sm:$0x1]
    %v92 = vld [vmem:[%s12] sm:$0xff]
    %v93 = vld [vmem:[%s12 + $0x8] sm:$0xff]
    %v94 = vld [vmem:[#allocation2] sm:$0x1]
    %v95 = vld [vmem:[%s14] sm:$0xff]
    %v96 = vld [vmem:[%s14 + $0x8] sm:$0xff]
    %v97 = vld [vmem:[%s15] sm:$0x1]
    %v98 = vld [vmem:[%s16] sm:$0xff]
    %v99 = vld [vmem:[%s16 + $0x8] sm:$0xff]
    %v100 = vld [vmem:[%s17] sm:$0x1]
    %vm101 = vcmp.ne.f32.partialorder %v69, 0.0
    %vm102 = vcmp.ne.f32.partialorder %v70, 0.0
    %vm103 = vcmp.ne.f32.partialorder %v71, 0.0
    %vm104 = vcmp.ne.f32.partialorder %v72, 0.0
    %v105 = vsel %vm101, 1, 0
    %v106 = vsel %vm102, 1, 0
    %v107 = vsel %vm103, 1, 0
    %v108 = vsel %vm104, 1, 0
    %v109 = vcvt.s32.f32 %v105
    %v110 = vcvt.s32.f32 %v106
    %v111 = vcvt.s32.f32 %v107
    %v112 = vcvt.s32.f32 %v108
    %v113 = vlaneseq
    %v114 = vshrl.u32 %v113, 7
    %v115 = vadd.s32 %v114, 8
    %v116 = vadd.s32 %v114, 16
    %v117 = vadd.s32 %v114, 24
    %v118 = vlaneseq
    %v119 = vand.u32 %v118, 127
    %vm120 = vcmp.eq.s32.totalorder %v114, %v119
    %vm121 = vcmp.eq.s32.totalorder %v115, %v119
    %vm122 = vcmp.eq.s32.totalorder %v116, %v119
    %vm123 = vcmp.eq.s32.totalorder %v117, %v119
    %v124 = vsel %vm120, 1, 0
    %v125 = vsel %vm121, 1, 0
    %v126 = vsel %vm122, 1, 0
    %v127 = vsel %vm123, 1, 0
    %v128 = vcvt.s32.f32 %v124
    %v129 = vcvt.s32.f32 %v125
    %v130 = vcvt.s32.f32 %v126
    %v131 = vcvt.s32.f32 %v127
    %v132 = vmax.f32 %v109, %v128
    %v133 = vmax.f32 %v110, %v129
    %v134 = vmax.f32 %v111, %v130
    %v135 = vmax.f32 %v112, %v131
    %vm136 = vcmask 261120
    %v137 = vsel %vm136, %v132, 0.0
    %138 = vadd.xlane.f32.xlu0 %v137
    %v139 = vpop.xlane.xlu0 %138
    %v140 = vsel %vm136, %v133, 0.0
    %141 = vadd.xlane.f32.xlu0 %v140
    %v142 = vpop.xlane.xlu0 %141
    %v143 = vsel %vm136, %v134, 0.0
    %144 = vadd.xlane.f32.xlu0 %v143
    %v145 = vpop.xlane.xlu0 %144
    %v146 = vsel %vm136, %v135, 0.0
    %147 = vadd.xlane.f32.xlu0 %v146
    %v148 = vpop.xlane.xlu0 %147
    %v149 = vadd.f32 %v137, %v140
    %v150 = vadd.f32 %v149, %v143
    %v151 = vadd.f32 %v150, %v146
    %v152 = vrot.slane %v151, 4
    %v153 = vadd.f32 %v151, %v152
    %v154 = vrot.slane %v153, 2
    %v155 = vadd.f32 %v153, %v154
    %v156 = vrot.slane %v155, 1
    %v157 = vadd.f32 %v155, %v156
    %v158 = vrsqrt.pop %v139
    %v159 = vmul.f32 %v158, %v139
    %v160 = vmul.f32 %v159, %v158
    %v161 = vmul.f32 0.5, %v160
    %v162 = vsub.f32 1.5, %v161
    %v163 = vmul.f32 %v158, %v162
    %vm164 = vweird.f32 %v139
    %vm165 = vweird.f32 %v158
    %vm166 = vmor %vm164, %vm165
    %v167 = vsel %vm166, %v158, %v163
    %v168 = vrsqrt.pop %v142
    %v169 = vmul.f32 %v168, %v142
    %v170 = vmul.f32 %v169, %v168
    %v171 = vmul.f32 0.5, %v170
    %v172 = vsub.f32 1.5, %v171
    %v173 = vmul.f32 %v168, %v172
    %vm174 = vweird.f32 %v142
    %vm175 = vweird.f32 %v168
    %vm176 = vmor %vm174, %vm175
    %v177 = vsel %vm176, %v168, %v173
    %v178 = vrsqrt.pop %v145
    %v179 = vmul.f32 %v178, %v145
    %v180 = vmul.f32 %v179, %v178
    %v181 = vmul.f32 0.5, %v180
    %v182 = vsub.f32 1.5, %v181
    %v183 = vmul.f32 %v178, %v182
    %vm184 = vweird.f32 %v145
    %vm185 = vweird.f32 %v178
    %vm186 = vmor %vm184, %vm185
    %v187 = vsel %vm186, %v178, %v183
    %v188 = vrsqrt.pop %v148
    %v189 = vmul.f32 %v188, %v148
    %v190 = vmul.f32 %v189, %v188
    %v191 = vmul.f32 0.5, %v190
    %v192 = vsub.f32 1.5, %v191
    %v193 = vmul.f32 %v188, %v192
    %vm194 = vweird.f32 %v148
    %vm195 = vweird.f32 %v188
    %vm196 = vmor %vm194, %vm195
    %v197 = vsel %vm196, %v188, %v193
    %v198 = vmul.f32 %v167, %v132
    %v199 = vmul.f32 %v177, %v133
    %v200 = vmul.f32 %v187, %v134
    %v201 = vmul.f32 %v197, %v135
    %v202 = vrsqrt.pop %v157
    %v203 = vmul.f32 %v202, %v157
    %v204 = vmul.f32 %v203, %v202
    %v205 = vmul.f32 0.5, %v204
    %v206 = vsub.f32 1.5, %v205
    %v207 = vmul.f32 %v202, %v206
    %vm208 = vweird.f32 %v157
    %vm209 = vweird.f32 %v202
    %vm210 = vmor %vm208, %vm209
    %v211 = vsel %vm210, %v202, %v207
    %v212 = vmul.f32 %v198, %v211
    %v213 = vmul.f32 %v199, %v211
    %v214 = vmul.f32 %v200, %v211
    %v215 = vmul.f32 %v201, %v211
    %vm216 = vcmask 130048
    %v218 = vsel %vm216, %v65, 0
    %v221 = vsel %vm216, %v66, 0
    %v224 = vsel %vm216, %v67, 0
    %v227 = vsel %vm216, %v68, 0
    %229 = vmatpush.msra.mxu0 0.0
    %230 = vmatpush.msra.mxu0 0.0
    %231 = vmatpush.msra.mxu0 0.0
    %232 = vmatpush.msra.mxu0 0.0
    %233 = vmatpush.msra.mxu0 0.0
    %234 = vmatpush.msra.mxu0 0.0
    %235 = vmatpush.msra.mxu0 0.0
    %236 = vmatpush.msra.mxu0 0.0
    %237 = vmatpush.msra.mxu0 0.0
    %238 = vmatpush.msra.mxu0 0.0
    %239 = vmatpush.msra.mxu0 0.0
    %240 = vmatpush.msra.mxu0 0.0
    %241 = vmatpush.msra.mxu0 0.0
    %242 = vmatpush.msra.mxu0 0.0
    %243 = vmatpush.msra.mxu0 %v74
    %244 = vmatpush.msra.mxu0 %v73
    %245 = vmatmul.f32.gmra.mxu0 %v218
    %v246 = vpop.f32.mrf.mxu0
    %v247 = vadd.f32 0.0, %v246
    %248 = vmatmul.f32.gmra.mxu0 %v221
    %v249 = vpop.f32.mrf.mxu0
    %v250 = vadd.f32 0.0, %v249
    %251 = vmatmul.f32.gmra.mxu0 %v224
    %v252 = vpop.f32.mrf.mxu0
    %v253 = vadd.f32 0.0, %v252
    %254 = vmatmul.f32.gmra.mxu0 %v227
    %v255 = vpop.f32.mrf.mxu0
    %v256 = vadd.f32 0.0, %v255
    %257 = vdwg.mxu0
    %v259 = vperm.slane %v75, 0
    %v262 = vsel %vm136, %v212, 0
    %v265 = vsel %vm136, %v213, 0
    %v268 = vsel %vm136, %v214, 0
    %v271 = vsel %vm136, %v215, 0
    %273 = vmatpush.msra.mxu0 0.0
    %274 = vmatpush.msra.mxu0 0.0
    %275 = vmatpush.msra.mxu0 0.0
    %276 = vmatpush.msra.mxu0 0.0
    %277 = vmatpush.msra.mxu0 0.0
    %278 = vmatpush.msra.mxu0 0.0
    %279 = vmatpush.msra.mxu0 0.0
    %280 = vmatpush.msra.mxu0 0.0
    %281 = vmatpush.msra.mxu0 0.0
    %282 = vmatpush.msra.mxu0 0.0
    %283 = vmatpush.msra.mxu0 0.0
    %284 = vmatpush.msra.mxu0 0.0
    %285 = vmatpush.msra.mxu0 %v256
    %286 = vmatpush.msra.mxu0 %v253
    %287 = vmatpush.msra.mxu0 %v250
    %288 = vmatpush.msra.mxu0 %v247
    %289 = vmatmul.f32.gmra.mxu0 %v262
    %v290 = vpop.f32.mrf.mxu0
    %v291 = vadd.f32 %v259, %v290
    %292 = vmatmul.f32.gmra.mxu0 %v265
    %v293 = vpop.f32.mrf.mxu0
    %v294 = vadd.f32 %v259, %v293
    %295 = vmatmul.f32.gmra.mxu0 %v268
    %v296 = vpop.f32.mrf.mxu0
    %v297 = vadd.f32 %v259, %v296
    %298 = vmatmul.f32.gmra.mxu0 %v271
    %v299 = vpop.f32.mrf.mxu0
    %v300 = vadd.f32 %v259, %v299
    %301 = vdwg.mxu0
    %v302 = vmax.f32 %v291, 0.0
    %v303 = vmax.f32 %v294, 0.0
    %v304 = vmax.f32 %v297, 0.0
    %v305 = vmax.f32 %v300, 0.0
    %v307 = vsel %vm136, %v302, 0
    %v310 = vsel %vm136, %v303, 0
    %v313 = vsel %vm136, %v304, 0
    %v316 = vsel %vm136, %v305, 0
    %318 = vmatpush.msra.mxu0 0.0
    %319 = vmatpush.msra.mxu0 0.0
    %320 = vmatpush.msra.mxu0 0.0
    %321 = vmatpush.msra.mxu0 0.0
    %322 = vmatpush.msra.mxu0 0.0
    %323 = vmatpush.msra.mxu0 0.0
    %324 = vmatpush.msra.mxu0 0.0
    %325 = vmatpush.msra.mxu0 0.0
    %326 = vmatpush.msra.mxu0 0.0
    %327 = vmatpush.msra.mxu0 0.0
    %328 = vmatpush.msra.mxu0 0.0
    %329 = vmatpush.msra.mxu0 0.0
    %330 = vmatpush.msra.mxu0 %v79
    %331 = vmatpush.msra.mxu0 %v78
    %332 = vmatpush.msra.mxu0 %v77
    %333 = vmatpush.msra.mxu0 %v76
    %334 = vmatmul.f32.gmra.mxu0 %v307
    %v335 = vpop.f32.mrf.mxu0
    %v336 = vadd.f32 0.0, %v335
    %337 = vmatmul.f32.gmra.mxu0 %v310
    %v338 = vpop.f32.mrf.mxu0
    %v339 = vadd.f32 0.0, %v338
    %340 = vmatmul.f32.gmra.mxu0 %v313
    %v341 = vpop.f32.mrf.mxu0
    %v342 = vadd.f32 0.0, %v341
    %343 = vmatmul.f32.gmra.mxu0 %v316
    %v344 = vpop.f32.mrf.mxu0
    %v345 = vadd.f32 0.0, %v344
    %346 = vdwg.mxu0
    %v348 = vperm.slane %v80, 0
    %350 = vmatpush.msra.mxu0 0.0
    %351 = vmatpush.msra.mxu0 0.0
    %352 = vmatpush.msra.mxu0 0.0
    %353 = vmatpush.msra.mxu0 0.0
    %354 = vmatpush.msra.mxu0 0.0
    %355 = vmatpush.msra.mxu0 0.0
    %356 = vmatpush.msra.mxu0 0.0
    %357 = vmatpush.msra.mxu0 0.0
    %358 = vmatpush.msra.mxu0 0.0
    %359 = vmatpush.msra.mxu0 0.0
    %360 = vmatpush.msra.mxu0 0.0
    %361 = vmatpush.msra.mxu0 0.0
    %362 = vmatpush.msra.mxu0 %v345
    %363 = vmatpush.msra.mxu0 %v342
    %364 = vmatpush.msra.mxu0 %v339
    %365 = vmatpush.msra.mxu0 %v336
    %366 = vmatmul.f32.gmra.mxu0 %v262
    %v367 = vpop.f32.mrf.mxu0
    %v368 = vadd.f32 %v348, %v367
    %369 = vmatmul.f32.gmra.mxu0 %v265
    %v370 = vpop.f32.mrf.mxu0
    %v371 = vadd.f32 %v348, %v370
    %372 = vmatmul.f32.gmra.mxu0 %v268
    %v373 = vpop.f32.mrf.mxu0
    %v374 = vadd.f32 %v348, %v373
    %375 = vmatmul.f32.gmra.mxu0 %v271
    %v376 = vpop.f32.mrf.mxu0
    %v377 = vadd.f32 %v348, %v376
    %378 = vdwg.mxu0
    %379 = vmatpush.msra.mxu0 0.0
    %380 = vmatpush.msra.mxu0 0.0
    %381 = vmatpush.msra.mxu0 0.0
    %382 = vmatpush.msra.mxu0 0.0
    %383 = vmatpush.msra.mxu0 0.0
    %384 = vmatpush.msra.mxu0 0.0
    %385 = vmatpush.msra.mxu0 0.0
    %386 = vmatpush.msra.mxu0 0.0
    %387 = vmatpush.msra.mxu0 0.0
    %388 = vmatpush.msra.mxu0 0.0
    %389 = vmatpush.msra.mxu0 0.0
    %390 = vmatpush.msra.mxu0 0.0
    %391 = vmatpush.msra.mxu0 0.0
    %392 = vmatpush.msra.mxu0 0.0
    %393 = vmatpush.msra.mxu0 %v82
    %394 = vmatpush.msra.mxu0 %v81
    %395 = vmatmul.f32.gmra.mxu0 %v218
    %v396 = vpop.f32.mrf.mxu0
    %v397 = vadd.f32 0.0, %v396
    %398 = vmatmul.f32.gmra.mxu0 %v221
    %v399 = vpop.f32.mrf.mxu0
    %v400 = vadd.f32 0.0, %v399
    %401 = vmatmul.f32.gmra.mxu0 %v224
    %v402 = vpop.f32.mrf.mxu0
    %v403 = vadd.f32 0.0, %v402
    %404 = vmatmul.f32.gmra.mxu0 %v227
    %v405 = vpop.f32.mrf.mxu0
    %v406 = vadd.f32 0.0, %v405
    %407 = vdwg.mxu0
    %v409 = vperm.slane %v83, 0
    %411 = vmatpush.msra.mxu0 0.0
    %412 = vmatpush.msra.mxu0 0.0
    %413 = vmatpush.msra.mxu0 0.0
    %414 = vmatpush.msra.mxu0 0.0
    %415 = vmatpush.msra.mxu0 0.0
    %416 = vmatpush.msra.mxu0 0.0
    %417 = vmatpush.msra.mxu0 0.0
    %418 = vmatpush.msra.mxu0 0.0
    %419 = vmatpush.msra.mxu0 0.0
    %420 = vmatpush.msra.mxu0 0.0
    %421 = vmatpush.msra.mxu0 0.0
    %422 = vmatpush.msra.mxu0 0.0
    %423 = vmatpush.msra.mxu0 %v406
    %424 = vmatpush.msra.mxu0 %v403
    %425 = vmatpush.msra.mxu0 %v400
    %426 = vmatpush.msra.mxu0 %v397
    %427 = vmatmul.f32.gmra.mxu0 %v262
    %v428 = vpop.f32.mrf.mxu0
    %v429 = vadd.f32 %v409, %v428
    %430 = vmatmul.f32.gmra.mxu0 %v265
    %v431 = vpop.f32.mrf.mxu0
    %v432 = vadd.f32 %v409, %v431
    %433 = vmatmul.f32.gmra.mxu0 %v268
    %v434 = vpop.f32.mrf.mxu0
    %v435 = vadd.f32 %v409, %v434
    %436 = vmatmul.f32.gmra.mxu0 %v271
    %v437 = vpop.f32.mrf.mxu0
    %v438 = vadd.f32 %v409, %v437
    %439 = vdwg.mxu0
    %v440 = vmax.f32 %v429, 0.0
    %v441 = vmax.f32 %v432, 0.0
    %v442 = vmax.f32 %v435, 0.0
    %v443 = vmax.f32 %v438, 0.0
    %v445 = vsel %vm136, %v440, 0
    %v448 = vsel %vm136, %v441, 0
    %v451 = vsel %vm136, %v442, 0
    %v454 = vsel %vm136, %v443, 0
    %456 = vmatpush.msra.mxu0 0.0
    %457 = vmatpush.msra.mxu0 0.0
    %458 = vmatpush.msra.mxu0 0.0
    %459 = vmatpush.msra.mxu0 0.0
    %460 = vmatpush.msra.mxu0 0.0
    %461 = vmatpush.msra.mxu0 0.0
    %462 = vmatpush.msra.mxu0 0.0
    %463 = vmatpush.msra.mxu0 0.0
    %464 = vmatpush.msra.mxu0 0.0
    %465 = vmatpush.msra.mxu0 0.0
    %466 = vmatpush.msra.mxu0 0.0
    %467 = vmatpush.msra.mxu0 0.0
    %468 = vmatpush.msra.mxu0 %v87
    %469 = vmatpush.msra.mxu0 %v86
    %470 = vmatpush.msra.mxu0 %v85
    %471 = vmatpush.msra.mxu0 %v84
    %472 = vmatmul.f32.gmra.mxu0 %v445
    %v473 = vpop.f32.mrf.mxu0
    %v474 = vadd.f32 0.0, %v473
    %475 = vmatmul.f32.gmra.mxu0 %v448
    %v476 = vpop.f32.mrf.mxu0
    %v477 = vadd.f32 0.0, %v476
    %478 = vmatmul.f32.gmra.mxu0 %v451
    %v479 = vpop.f32.mrf.mxu0
    %v480 = vadd.f32 0.0, %v479
    %481 = vmatmul.f32.gmra.mxu0 %v454
    %v482 = vpop.f32.mrf.mxu0
    %v483 = vadd.f32 0.0, %v482
    %484 = vdwg.mxu0
    %v486 = vperm.slane %v88, 0
    %488 = vmatpush.msra.mxu0 0.0
    %489 = vmatpush.msra.mxu0 0.0
    %490 = vmatpush.msra.mxu0 0.0
    %491 = vmatpush.msra.mxu0 0.0
    %492 = vmatpush.msra.mxu0 0.0
    %493 = vmatpush.msra.mxu0 0.0
    %494 = vmatpush.msra.mxu0 0.0
    %495 = vmatpush.msra.mxu0 0.0
    %496 = vmatpush.msra.mxu0 0.0
    %497 = vmatpush.msra.mxu0 0.0
    %498 = vmatpush.msra.mxu0 0.0
    %499 = vmatpush.msra.mxu0 0.0
    %500 = vmatpush.msra.mxu0 %v483
    %501 = vmatpush.msra.mxu0 %v480
    %502 = vmatpush.msra.mxu0 %v477
    %503 = vmatpush.msra.mxu0 %v474
    %504 = vmatmul.f32.gmra.mxu0 %v262
    %v505 = vpop.f32.mrf.mxu0
    %v506 = vadd.f32 %v486, %v505
    %507 = vmatmul.f32.gmra.mxu0 %v265
    %v508 = vpop.f32.mrf.mxu0
    %v509 = vadd.f32 %v486, %v508
    %510 = vmatmul.f32.gmra.mxu0 %v268
    %v511 = vpop.f32.mrf.mxu0
    %v512 = vadd.f32 %v486, %v511
    %513 = vmatmul.f32.gmra.mxu0 %v271
    %v514 = vpop.f32.mrf.mxu0
    %v515 = vadd.f32 %v486, %v514
    %516 = vdwg.mxu0
    %vm517 = vcmask 39936
    %v518 = vsel %vm517, %v368, -inf
    %519 = vmax.xlane.f32.xlu0 %v518
    %v520 = vpop.xlane.xlu0 %519
    %v521 = vsel %vm517, %v371, -inf
    %522 = vmax.xlane.f32.xlu0 %v521
    %v523 = vpop.xlane.xlu0 %522
    %v524 = vsel %vm517, %v374, -inf
    %525 = vmax.xlane.f32.xlu0 %v524
    %v526 = vpop.xlane.xlu0 %525
    %v527 = vsel %vm517, %v377, -inf
    %528 = vmax.xlane.f32.xlu0 %v527
    %v529 = vpop.xlane.xlu0 %528
    %v530 = vsub.f32 %v368, %v520
    %v531 = vsub.f32 %v371, %v523
    %v532 = vsub.f32 %v374, %v526
    %v533 = vsub.f32 %v377, %v529
    %v534 = vmul.f32 %v530, 1.442695
    %v535 = vpow.pop %v534
    %v536 = vmul.f32 %v531, 1.442695
    %v537 = vpow.pop %v536
    %v538 = vmul.f32 %v532, 1.442695
    %v539 = vpow.pop %v538
    %v540 = vmul.f32 %v533, 1.442695
    %v541 = vpow.pop %v540
    %v542 = vsel %vm517, %v535, 0.0
    %543 = vadd.xlane.f32.xlu0 %v542
    %v544 = vpop.xlane.xlu0 %543
    %v545 = vsel %vm517, %v537, 0.0
    %546 = vadd.xlane.f32.xlu0 %v545
    %v547 = vpop.xlane.xlu0 %546
    %v548 = vsel %vm517, %v539, 0.0
    %549 = vadd.xlane.f32.xlu0 %v548
    %v550 = vpop.xlane.xlu0 %549
    %v551 = vsel %vm517, %v541, 0.0
    %552 = vadd.xlane.f32.xlu0 %v551
    %v553 = vpop.xlane.xlu0 %552
    %v554 = vrcp.pop %v544
    %v555 = vmul.f32 %v544, %v554
    %v556 = vsub.f32 1.0, %v555
    %v557 = vmul.f32 %v554, %v556
    %v558 = vadd.f32 %v554, %v557
    %vm559 = vweird.f32 %v544
    %vm560 = vweird.f32 %v554
    %vm561 = vmor %vm559, %vm560
    %v562 = vsel %vm561, %v554, %v558
    %v563 = vand.u32 2147483647, %v544
    %vm564 = vcmp.eq.f32.partialorder %v563, 8.507059e+37
    %v565 = vand.u32 %v544, 2147483648
    %v566 = vor.u32 1.1754944e-38, %v565
    %v567 = vsel %vm564, %v566, %v562
    %v568 = vmul.f32 %v535, %v567
    %v569 = vrcp.pop %v547
    %v570 = vmul.f32 %v547, %v569
    %v571 = vsub.f32 1.0, %v570
    %v572 = vmul.f32 %v569, %v571
    %v573 = vadd.f32 %v569, %v572
    %vm574 = vweird.f32 %v547
    %vm575 = vweird.f32 %v569
    %vm576 = vmor %vm574, %vm575
    %v577 = vsel %vm576, %v569, %v573
    %v578 = vand.u32 2147483647, %v547
    %vm579 = vcmp.eq.f32.partialorder %v578, 8.507059e+37
    %v580 = vand.u32 %v547, 2147483648
    %v581 = vor.u32 1.1754944e-38, %v580
    %v582 = vsel %vm579, %v581, %v577
    %v583 = vmul.f32 %v537, %v582
    %v584 = vrcp.pop %v550
    %v585 = vmul.f32 %v550, %v584
    %v586 = vsub.f32 1.0, %v585
    %v587 = vmul.f32 %v584, %v586
    %v588 = vadd.f32 %v584, %v587
    %vm589 = vweird.f32 %v550
    %vm590 = vweird.f32 %v584
    %vm591 = vmor %vm589, %vm590
    %v592 = vsel %vm591, %v584, %v588
    %v593 = vand.u32 2147483647, %v550
    %vm594 = vcmp.eq.f32.partialorder %v593, 8.507059e+37
    %v595 = vand.u32 %v550, 2147483648
    %v596 = vor.u32 1.1754944e-38, %v595
    %v597 = vsel %vm594, %v596, %v592
    %v598 = vmul.f32 %v539, %v597
    %v599 = vrcp.pop %v553
    %v600 = vmul.f32 %v553, %v599
    %v601 = vsub.f32 1.0, %v600
    %v602 = vmul.f32 %v599, %v601
    %v603 = vadd.f32 %v599, %v602
    %vm604 = vweird.f32 %v553
    %vm605 = vweird.f32 %v599
    %vm606 = vmor %vm604, %vm605
    %v607 = vsel %vm606, %v599, %v603
    %v608 = vand.u32 2147483647, %v553
    %vm609 = vcmp.eq.f32.partialorder %v608, 8.507059e+37
    %v610 = vand.u32 %v553, 2147483648
    %v611 = vor.u32 1.1754944e-38, %v610
    %v612 = vsel %vm609, %v611, %v607
    %v613 = vmul.f32 %v541, %v612
    %614 = vxpose.xlu0.b32.start [1/16] %v568, 128
    %615 = vxpose.xlu0.b32.cont [2/16] %v583, 128
    %616 = vxpose.xlu0.b32.cont [3/16] %v598, 128
    %617 = vxpose.xlu0.b32.cont [4/16] %v613, 128
    %618 = vxpose.xlu0.b32.cont [5/16] 0.0, 128
    %619 = vxpose.xlu0.b32.cont [6/16] 0.0, 128
    %620 = vxpose.xlu0.b32.cont [7/16] 0.0, 128
    %621 = vxpose.xlu0.b32.cont [8/16] 0.0, 128
    %622 = vxpose.xlu0.b32.cont [9/16] 0.0, 128
    %623 = vxpose.xlu0.b32.cont [10/16] 0.0, 128
    %624 = vxpose.xlu0.b32.cont [11/16] 0.0, 128
    %625 = vxpose.xlu0.b32.cont [12/16] 0.0, 128
    %626 = vxpose.xlu0.b32.cont [13/16] 0.0, 128
    %627 = vxpose.xlu0.b32.cont [14/16] 0.0, 128
    %628 = vxpose.xlu0.b32.cont [15/16] 0.0, 128
    %629 = vxpose.xlu0.b32.end [16/16] 0.0, 128
    %v630 = vpop.trf.xlu0
    %v631 = vpop.trf.xlu0
    %v632 = vpop.trf.xlu0
    %v633 = vpop.trf.xlu0
    %v634 = vpop.trf.xlu0
    %v635 = vpop.trf.xlu0
    %v636 = vpop.trf.xlu0
    %v637 = vpop.trf.xlu0
    %v638 = vpop.trf.xlu0
    %v639 = vpop.trf.xlu0
    %v640 = vpop.trf.xlu0
    %v641 = vpop.trf.xlu0
    %v642 = vpop.trf.xlu0
    %v643 = vpop.trf.xlu0
    %v644 = vpop.trf.xlu0
    %v645 = vpop.trf.xlu0
    %v647 = vsel %vm136, %v630, 0
    %649 = vmatpush.msra.mxu0 0.0
    %650 = vmatpush.msra.mxu0 0.0
    %651 = vmatpush.msra.mxu0 0.0
    %652 = vmatpush.msra.mxu0 0.0
    %653 = vmatpush.msra.mxu0 0.0
    %654 = vmatpush.msra.mxu0 0.0
    %655 = vmatpush.msra.mxu0 0.0
    %656 = vmatpush.msra.mxu0 0.0
    %657 = vmatpush.msra.mxu0 0.0
    %658 = vmatpush.msra.mxu0 0.0
    %659 = vmatpush.msra.mxu0 0.0
    %660 = vmatpush.msra.mxu0 0.0
    %661 = vmatpush.msra.mxu0 %v515
    %662 = vmatpush.msra.mxu0 %v512
    %663 = vmatpush.msra.mxu0 %v509
    %664 = vmatpush.msra.mxu0 %v506
    %665 = vmatmul.f32.gmra.mxu0 %v647
    %v666 = vpop.f32.mrf.mxu0
    %v667 = vadd.f32 0.0, %v666
    %668 = vdwg.mxu0
    %669 = vmatpush.msra.mxu0 0.0
    %670 = vmatpush.msra.mxu0 0.0
    %671 = vmatpush.msra.mxu0 0.0
    %672 = vmatpush.msra.mxu0 0.0
    %673 = vmatpush.msra.mxu0 0.0
    %674 = vmatpush.msra.mxu0 0.0
    %675 = vmatpush.msra.mxu0 0.0
    %676 = vmatpush.msra.mxu0 0.0
    %677 = vmatpush.msra.mxu0 0.0
    %678 = vmatpush.msra.mxu0 0.0
    %679 = vmatpush.msra.mxu0 0.0
    %680 = vmatpush.msra.mxu0 0.0
    %681 = vmatpush.msra.mxu0 %v72
    %682 = vmatpush.msra.mxu0 %v71
    %683 = vmatpush.msra.mxu0 %v70
    %684 = vmatpush.msra.mxu0 %v69
    %685 = vmatmul.f32.gmra.mxu0 %v647
    %v686 = vpop.f32.mrf.mxu0
    %v687 = vadd.f32 0.0, %v686
    %688 = vdwg.mxu0
    %v690 = vsel %vm136, %v687, 0
    %692 = vmatpush.msra.mxu0 0.0
    %693 = vmatpush.msra.mxu0 0.0
    %694 = vmatpush.msra.mxu0 0.0
    %695 = vmatpush.msra.mxu0 0.0
    %696 = vmatpush.msra.mxu0 0.0
    %697 = vmatpush.msra.mxu0 0.0
    %698 = vmatpush.msra.mxu0 0.0
    %699 = vmatpush.msra.mxu0 0.0
    %700 = vmatpush.msra.mxu0 0.0
    %701 = vmatpush.msra.mxu0 0.0
    %702 = vmatpush.msra.mxu0 0.0
    %703 = vmatpush.msra.mxu0 0.0
    %704 = vmatpush.msra.mxu0 %v613
    %705 = vmatpush.msra.mxu0 %v598
    %706 = vmatpush.msra.mxu0 %v583
    %707 = vmatpush.msra.mxu0 %v568
    %708 = vmatmul.f32.gmra.mxu0 %v690
    %v709 = vpop.f32.mrf.mxu0
    %v710 = vadd.f32 0.0, %v709
    %711 = vdwg.mxu0
    %v713 = vsel %vm517, %v568, 0
    %v716 = vsel %vm517, %v583, 0
    %v719 = vsel %vm517, %v598, 0
    %v722 = vsel %vm517, %v613, 0
    %vm724 = vcmask 1044480
    %v725 = vsel %vm724, %v630, 0
    %727 = vmatpush.msra.mxu0 0.0
    %728 = vmatpush.msra.mxu0 0.0
    %729 = vmatpush.msra.mxu0 0.0
    %730 = vmatpush.msra.mxu0 0.0
    %731 = vmatpush.msra.mxu0 0.0
    %732 = vmatpush.msra.mxu0 0.0
    %733 = vmatpush.msra.mxu0 0.0
    %734 = vmatpush.msra.mxu0 0.0
    %735 = vmatpush.msra.mxu0 0.0
    %736 = vmatpush.msra.mxu0 0.0
    %737 = vmatpush.msra.mxu0 0.0
    %738 = vmatpush.msra.mxu0 0.0
    %739 = vmatpush.msra.mxu0 0.0
    %740 = vmatpush.msra.mxu0 0.0
    %741 = vmatpush.msra.mxu0 0.0
    %742 = vmatpush.msra.mxu0 %v725
    %743 = vmatmul.f32.gmra.mxu0 %v713
    %v744 = vpop.f32.mrf.mxu0
    %v745 = vadd.f32 0.0, %v744
    %746 = vmatmul.f32.gmra.mxu0 %v716
    %v747 = vpop.f32.mrf.mxu0
    %v748 = vadd.f32 0.0, %v747
    %749 = vmatmul.f32.gmra.mxu0 %v719
    %v750 = vpop.f32.mrf.mxu0
    %v751 = vadd.f32 0.0, %v750
    %752 = vmatmul.f32.gmra.mxu0 %v722
    %v753 = vpop.f32.mrf.mxu0
    %v754 = vadd.f32 0.0, %v753
    %755 = vdwg.mxu0
    %v756 = vsub.f32 %v69, %v745
    %v757 = vsub.f32 %v70, %v748
    %v758 = vsub.f32 %v71, %v751
    %v759 = vsub.f32 %v72, %v754
    %v760 = vmul.f32 %v756, %v756
    %v761 = vmul.f32 %v757, %v757
    %v762 = vmul.f32 %v758, %v758
    %v763 = vmul.f32 %v759, %v759
    %v764 = vsel %vm136, %v760, 0.0
    %v765 = vsel %vm136, %v761, 0.0
    %v766 = vadd.f32 %v764, %v765
    %v767 = vsel %vm136, %v762, 0.0
    %v768 = vadd.f32 %v766, %v767
    %v769 = vsel %vm136, %v763, 0.0
    %v770 = vadd.f32 %v768, %v769
    %771 = vadd.xlane.f32.xlu0 %v770
    %v772 = vpop.xlane.xlu0 %771
    %v773 = vrot.slane %v772, 4
    %v774 = vadd.f32 %v772, %v773
    %v775 = vrot.slane %v774, 2
    %v776 = vadd.f32 %v774, %v775
    %v777 = vrot.slane %v776, 1
    %v778 = vadd.f32 %v776, %v777
    %s779 = vtos %v778
    %v780 = vstv %s779
    %v781 = vrsqrt.pop %v780
    %v782 = vmul.f32 %v781, %v780
    %v783 = vmul.f32 %v782, %v781
    %v784 = vmul.f32 0.5, %v783
    %v785 = vsub.f32 1.5, %v784
    %v786 = vmul.f32 %v781, %v785
    %v787 = vmul.f32 %v780, %v786
    %vm788 = vcmp.eq.f32.partialorder %v780, inf
    %v789 = vsel %vm788, %v780, %v787
    %vm790 = vcmp.eq.f32.partialorder %v780, 0.0
    %v791 = vand.u32 %v780, 2147483648
    %v792 = vsel %vm790, %v791, %v789
    %s793 = vtos %v792
    %v794 = vrcp.pop 1024.0
    %v795 = vmul.f32 1024.0, %v794
    %v796 = vsub.f32 1.0, %v795
    %v797 = vmul.f32 %v794, %v796
    %v798 = vadd.f32 %v794, %v797
    %vm799 = vweird.f32 %v794
    %v800 = vsel %vm799, %v794, %v798
    %s801 = vtos %v800
    %s802 = smul.f32 %s793, %s801
    %v803 = vsub.f32 0.0, %v568
    %v804 = vsub.f32 0.0, %v583
    %v805 = vsub.f32 0.0, %v598
    %v806 = vsub.f32 0.0, %v613
    %v807 = vadd.f32 %v568, 1e-15
    %v808 = vadd.f32 %v583, 1e-15
    %v809 = vadd.f32 %v598, 1e-15
    %v810 = vadd.f32 %v613, 1e-15
    %v811 = vlog2.pop %v807
    %v812 = vmul.f32 %v811, 0.6931472
    %v813 = vlog2.pop %v808
    %v814 = vmul.f32 %v813, 0.6931472
    %v815 = vlog2.pop %v809
    %v816 = vmul.f32 %v815, 0.6931472
    %v817 = vlog2.pop %v810
    %v818 = vmul.f32 %v817, 0.6931472
    %v819 = vmul.f32 %v803, %v812
    %v820 = vmul.f32 %v804, %v814
    %v821 = vmul.f32 %v805, %v816
    %v822 = vmul.f32 %v806, %v818
    %v823 = vsel %vm517, %v819, 0.0
    %v824 = vsel %vm517, %v820, 0.0
    %v825 = vadd.f32 %v823, %v824
    %v826 = vsel %vm517, %v821, 0.0
    %v827 = vadd.f32 %v825, %v826
    %v828 = vsel %vm517, %v822, 0.0
    %v829 = vadd.f32 %v827, %v828
    %830 = vadd.xlane.f32.xlu0 %v829
    %v831 = vpop.xlane.xlu0 %830
    %v832 = vrot.slane %v831, 4
    %v833 = vadd.f32 %v831, %v832
    %v834 = vrot.slane %v833, 2
    %v835 = vadd.f32 %v833, %v834
    %v836 = vrot.slane %v835, 1
    %v837 = vadd.f32 %v835, %v836
    %s838 = vtos %v837
    %v839 = vrcp.pop 32.0
    %v840 = vmul.f32 32.0, %v839
    %v841 = vsub.f32 1.0, %v840
    %v842 = vmul.f32 %v839, %v841
    %v843 = vadd.f32 %v839, %v842
    %vm844 = vweird.f32 %v839
    %v845 = vsel %vm844, %v839, %v843
    %s846 = vtos %v845
    %s847 = smul.f32 %s838, %s846
    %vm848 = vcmp.ne.f32.partialorder %v710, 0.0
    %v849 = vsel %vm848, 1, 0
    %v850 = vcvt.s32.f32 %v849
    %vm851 = vcmp.ne.f32.partialorder %v850, 0.0
    %v852 = vsel %vm851, 1, 0
    %v853 = vcvt.s32.f32 %v852
    %v854 = vmax.f32 %v853, %v128
    %vm855 = vcmask 36864
    %v856 = vsel %vm855, %v854, 0.0
    %857 = vadd.xlane.f32.xlu0 %v856
    %v858 = vpop.xlane.xlu0 %857
    %v859 = vrot.slane %v856, 4
    %v860 = vadd.f32 %v856, %v859
    %v861 = vrot.slane %v860, 2
    %v862 = vadd.f32 %v860, %v861
    %v863 = vrot.slane %v862, 1
    %v864 = vadd.f32 %v862, %v863
    %v865 = vrsqrt.pop %v858
    %v866 = vmul.f32 %v865, %v858
    %v867 = vmul.f32 %v866, %v865
    %v868 = vmul.f32 0.5, %v867
    %v869 = vsub.f32 1.5, %v868
    %v870 = vmul.f32 %v865, %v869
    %vm871 = vweird.f32 %v858
    %vm872 = vweird.f32 %v865
    %vm873 = vmor %vm871, %vm872
    %v874 = vsel %vm873, %v865, %v870
    %v875 = vmul.f32 %v874, %v854
    %v876 = vrsqrt.pop %v864
    %v877 = vmul.f32 %v876, %v864
    %v878 = vmul.f32 %v877, %v876
    %v879 = vmul.f32 0.5, %v878
    %v880 = vsub.f32 1.5, %v879
    %v881 = vmul.f32 %v876, %v880
    %vm882 = vweird.f32 %v864
    %vm883 = vweird.f32 %v876
    %vm884 = vmor %vm882, %vm883
    %v885 = vsel %vm884, %v876, %v881
    %v886 = vmul.f32 %v875, %v885
    %v888 = vsel %vm216, %v667, 0
    %890 = vmatpush.msra.mxu0 0.0
    %891 = vmatpush.msra.mxu0 0.0
    %892 = vmatpush.msra.mxu0 0.0
    %893 = vmatpush.msra.mxu0 0.0
    %894 = vmatpush.msra.mxu0 0.0
    %895 = vmatpush.msra.mxu0 0.0
    %896 = vmatpush.msra.mxu0 0.0
    %897 = vmatpush.msra.mxu0 0.0
    %898 = vmatpush.msra.mxu0 0.0
    %899 = vmatpush.msra.mxu0 0.0
    %900 = vmatpush.msra.mxu0 0.0
    %901 = vmatpush.msra.mxu0 0.0
    %902 = vmatpush.msra.mxu0 0.0
    %903 = vmatpush.msra.mxu0 0.0
    %904 = vmatpush.msra.mxu0 %v90
    %905 = vmatpush.msra.mxu0 %v89
    %906 = vmatmul.f32.gmra.mxu0 %v888
    %v907 = vpop.f32.mrf.mxu0
    %v908 = vadd.f32 0.0, %v907
    %909 = vdwg.mxu0
    %v911 = vperm.slane %v91, 0
    %v914 = vsel %vm517, %v886, 0
    %v917 = vsel %vm724, %v908, 0
    %919 = vmatpush.msra.mxu0 0.0
    %920 = vmatpush.msra.mxu0 0.0
    %921 = vmatpush.msra.mxu0 0.0
    %922 = vmatpush.msra.mxu0 0.0
    %923 = vmatpush.msra.mxu0 0.0
    %924 = vmatpush.msra.mxu0 0.0
    %925 = vmatpush.msra.mxu0 0.0
    %926 = vmatpush.msra.mxu0 0.0
    %927 = vmatpush.msra.mxu0 0.0
    %928 = vmatpush.msra.mxu0 0.0
    %929 = vmatpush.msra.mxu0 0.0
    %930 = vmatpush.msra.mxu0 0.0
    %931 = vmatpush.msra.mxu0 0.0
    %932 = vmatpush.msra.mxu0 0.0
    %933 = vmatpush.msra.mxu0 0.0
    %934 = vmatpush.msra.mxu0 %v917
    %935 = vmatmul.f32.gmra.mxu0 %v914
    %v936 = vpop.f32.mrf.mxu0
    %v937 = vadd.f32 %v911, %v936
    %938 = vdwg.mxu0
    %v939 = vmax.f32 %v937, 0.0
    %v941 = vsel %vm216, %v939, 0
    %943 = vmatpush.msra.mxu0 0.0
    %944 = vmatpush.msra.mxu0 0.0
    %945 = vmatpush.msra.mxu0 0.0
    %946 = vmatpush.msra.mxu0 0.0
    %947 = vmatpush.msra.mxu0 0.0
    %948 = vmatpush.msra.mxu0 0.0
    %949 = vmatpush.msra.mxu0 0.0
    %950 = vmatpush.msra.mxu0 0.0
    %951 = vmatpush.msra.mxu0 0.0
    %952 = vmatpush.msra.mxu0 0.0
    %953 = vmatpush.msra.mxu0 0.0
    %954 = vmatpush.msra.mxu0 0.0
    %955 = vmatpush.msra.mxu0 0.0
    %956 = vmatpush.msra.mxu0 0.0
    %957 = vmatpush.msra.mxu0 %v93
    %958 = vmatpush.msra.mxu0 %v92
    %959 = vmatmul.f32.gmra.mxu0 %v941
    %v960 = vpop.f32.mrf.mxu0
    %v961 = vadd.f32 0.0, %v960
    %962 = vdwg.mxu0
    %v964 = vperm.slane %v94, 0
    %v967 = vsel %vm724, %v961, 0
    %969 = vmatpush.msra.mxu0 0.0
    %970 = vmatpush.msra.mxu0 0.0
    %971 = vmatpush.msra.mxu0 0.0
    %972 = vmatpush.msra.mxu0 0.0
    %973 = vmatpush.msra.mxu0 0.0
    %974 = vmatpush.msra.mxu0 0.0
    %975 = vmatpush.msra.mxu0 0.0
    %976 = vmatpush.msra.mxu0 0.0
    %977 = vmatpush.msra.mxu0 0.0
    %978 = vmatpush.msra.mxu0 0.0
    %979 = vmatpush.msra.mxu0 0.0
    %980 = vmatpush.msra.mxu0 0.0
    %981 = vmatpush.msra.mxu0 0.0
    %982 = vmatpush.msra.mxu0 0.0
    %983 = vmatpush.msra.mxu0 0.0
    %984 = vmatpush.msra.mxu0 %v967
    %985 = vmatmul.f32.gmra.mxu0 %v914
    %v986 = vpop.f32.mrf.mxu0
    %v987 = vadd.f32 %v964, %v986
    %988 = vdwg.mxu0
    %989 = vmatpush.msra.mxu0 0.0
    %990 = vmatpush.msra.mxu0 0.0
    %991 = vmatpush.msra.mxu0 0.0
    %992 = vmatpush.msra.mxu0 0.0
    %993 = vmatpush.msra.mxu0 0.0
    %994 = vmatpush.msra.mxu0 0.0
    %995 = vmatpush.msra.mxu0 0.0
    %996 = vmatpush.msra.mxu0 0.0
    %997 = vmatpush.msra.mxu0 0.0
    %998 = vmatpush.msra.mxu0 0.0
    %999 = vmatpush.msra.mxu0 0.0
    %1000 = vmatpush.msra.mxu0 0.0
    %1001 = vmatpush.msra.mxu0 0.0
    %1002 = vmatpush.msra.mxu0 0.0
    %1003 = vmatpush.msra.mxu0 %v96
    %1004 = vmatpush.msra.mxu0 %v95
    %1005 = vmatmul.f32.gmra.mxu0 %v888
    %v1006 = vpop.f32.mrf.mxu0
    %v1007 = vadd.f32 0.0, %v1006
    %1008 = vdwg.mxu0
    %v1010 = vperm.slane %v97, 0
    %v1013 = vsel %vm724, %v1007, 0
    %1015 = vmatpush.msra.mxu0 0.0
    %1016 = vmatpush.msra.mxu0 0.0
    %1017 = vmatpush.msra.mxu0 0.0
    %1018 = vmatpush.msra.mxu0 0.0
    %1019 = vmatpush.msra.mxu0 0.0
    %1020 = vmatpush.msra.mxu0 0.0
    %1021 = vmatpush.msra.mxu0 0.0
    %1022 = vmatpush.msra.mxu0 0.0
    %1023 = vmatpush.msra.mxu0 0.0
    %1024 = vmatpush.msra.mxu0 0.0
    %1025 = vmatpush.msra.mxu0 0.0
    %1026 = vmatpush.msra.mxu0 0.0
    %1027 = vmatpush.msra.mxu0 0.0
    %1028 = vmatpush.msra.mxu0 0.0
    %1029 = vmatpush.msra.mxu0 0.0
    %1030 = vmatpush.msra.mxu0 %v1013
    %1031 = vmatmul.f32.gmra.mxu0 %v914
    %v1032 = vpop.f32.mrf.mxu0
    %v1033 = vadd.f32 %v1010, %v1032
    %1034 = vdwg.mxu0
    %v1035 = vmax.f32 %v1033, 0.0
    %v1037 = vsel %vm216, %v1035, 0
    %1039 = vmatpush.msra.mxu0 0.0
    %1040 = vmatpush.msra.mxu0 0.0
    %1041 = vmatpush.msra.mxu0 0.0
    %1042 = vmatpush.msra.mxu0 0.0
    %1043 = vmatpush.msra.mxu0 0.0
    %1044 = vmatpush.msra.mxu0 0.0
    %1045 = vmatpush.msra.mxu0 0.0
    %1046 = vmatpush.msra.mxu0 0.0
    %1047 = vmatpush.msra.mxu0 0.0
    %1048 = vmatpush.msra.mxu0 0.0
    %1049 = vmatpush.msra.mxu0 0.0
    %1050 = vmatpush.msra.mxu0 0.0
    %1051 = vmatpush.msra.mxu0 0.0
    %1052 = vmatpush.msra.mxu0 0.0
    %1053 = vmatpush.msra.mxu0 %v99
    %1054 = vmatpush.msra.mxu0 %v98
    %1055 = vmatmul.f32.gmra.mxu0 %v1037
    %v1056 = vpop.f32.mrf.mxu0
    %v1057 = vadd.f32 0.0, %v1056
    %1058 = vdwg.mxu0
    %v1060 = vperm.slane %v100, 0
    %v1063 = vsel %vm724, %v1057, 0
    %1065 = vmatpush.msra.mxu0 0.0
    %1066 = vmatpush.msra.mxu0 0.0
    %1067 = vmatpush.msra.mxu0 0.0
    %1068 = vmatpush.msra.mxu0 0.0
    %1069 = vmatpush.msra.mxu0 0.0
    %1070 = vmatpush.msra.mxu0 0.0
    %1071 = vmatpush.msra.mxu0 0.0
    %1072 = vmatpush.msra.mxu0 0.0
    %1073 = vmatpush.msra.mxu0 0.0
    %1074 = vmatpush.msra.mxu0 0.0
    %1075 = vmatpush.msra.mxu0 0.0
    %1076 = vmatpush.msra.mxu0 0.0
    %1077 = vmatpush.msra.mxu0 0.0
    %1078 = vmatpush.msra.mxu0 0.0
    %1079 = vmatpush.msra.mxu0 0.0
    %1080 = vmatpush.msra.mxu0 %v1063
    %1081 = vmatmul.f32.gmra.mxu0 %v914
    %v1082 = vpop.f32.mrf.mxu0
    %v1083 = vadd.f32 %v1060, %v1082
    %1084 = vdwg.mxu0
    %v1085 = vsub.f32 %v987, %v987
    %v1086 = vmul.f32 %v1085, 1.442695
    %v1087 = vpow.pop %v1086
    %v1088 = vadd.f32 %v1087, 0.0
    %v1089 = vrcp.pop %v1088
    %v1090 = vmul.f32 %v1088, %v1089
    %v1091 = vsub.f32 1.0, %v1090
    %v1092 = vmul.f32 %v1089, %v1091
    %v1093 = vadd.f32 %v1089, %v1092
    %vm1094 = vweird.f32 %v1088
    %vm1095 = vweird.f32 %v1089
    %vm1096 = vmor %vm1094, %vm1095
    %v1097 = vsel %vm1096, %v1089, %v1093
    %v1098 = vand.u32 2147483647, %v1088
    %vm1099 = vcmp.eq.f32.partialorder %v1098, 8.507059e+37
    %v1100 = vand.u32 %v1088, 2147483648
    %v1101 = vor.u32 1.1754944e-38, %v1100
    %v1102 = vsel %vm1099, %v1101, %v1097
    %v1103 = vmul.f32 %v1087, %v1102
    %1104 = vxpose.xlu0.b32.start [1/16] %v1103, 128
    %1105 = vxpose.xlu0.b32.cont [2/16] 0.0, 128
    %1106 = vxpose.xlu0.b32.cont [3/16] 0.0, 128
    %1107 = vxpose.xlu0.b32.cont [4/16] 0.0, 128
    %1108 = vxpose.xlu0.b32.cont [5/16] 0.0, 128
    %1109 = vxpose.xlu0.b32.cont [6/16] 0.0, 128
    %1110 = vxpose.xlu0.b32.cont [7/16] 0.0, 128
    %1111 = vxpose.xlu0.b32.cont [8/16] 0.0, 128
    %1112 = vxpose.xlu0.b32.cont [9/16] 0.0, 128
    %1113 = vxpose.xlu0.b32.cont [10/16] 0.0, 128
    %1114 = vxpose.xlu0.b32.cont [11/16] 0.0, 128
    %1115 = vxpose.xlu0.b32.cont [12/16] 0.0, 128
    %1116 = vxpose.xlu0.b32.cont [13/16] 0.0, 128
    %1117 = vxpose.xlu0.b32.cont [14/16] 0.0, 128
    %1118 = vxpose.xlu0.b32.cont [15/16] 0.0, 128
    %1119 = vxpose.xlu0.b32.end [16/16] 0.0, 128
    %v1120 = vpop.trf.xlu0
    %v1121 = vpop.trf.xlu0
    %v1122 = vpop.trf.xlu0
    %v1123 = vpop.trf.xlu0
    %v1124 = vpop.trf.xlu0
    %v1125 = vpop.trf.xlu0
    %v1126 = vpop.trf.xlu0
    %v1127 = vpop.trf.xlu0
    %v1128 = vpop.trf.xlu0
    %v1129 = vpop.trf.xlu0
    %v1130 = vpop.trf.xlu0
    %v1131 = vpop.trf.xlu0
    %v1132 = vpop.trf.xlu0
    %v1133 = vpop.trf.xlu0
    %v1134 = vpop.trf.xlu0
    %v1135 = vpop.trf.xlu0
    %v1137 = vsel %vm517, %v1120, 0
    %v1140 = vsel %vm724, %v1083, 0
    %1142 = vmatpush.msra.mxu0 0.0
    %1143 = vmatpush.msra.mxu0 0.0
    %1144 = vmatpush.msra.mxu0 0.0
    %1145 = vmatpush.msra.mxu0 0.0
    %1146 = vmatpush.msra.mxu0 0.0
    %1147 = vmatpush.msra.mxu0 0.0
    %1148 = vmatpush.msra.mxu0 0.0
    %1149 = vmatpush.msra.mxu0 0.0
    %1150 = vmatpush.msra.mxu0 0.0
    %1151 = vmatpush.msra.mxu0 0.0
    %1152 = vmatpush.msra.mxu0 0.0
    %1153 = vmatpush.msra.mxu0 0.0
    %1154 = vmatpush.msra.mxu0 0.0
    %1155 = vmatpush.msra.mxu0 0.0
    %1156 = vmatpush.msra.mxu0 0.0
    %1157 = vmatpush.msra.mxu0 %v1140
    %1158 = vmatmul.f32.gmra.mxu0 %v1137
    %v1159 = vpop.f32.mrf.mxu0
    %v1160 = vadd.f32 0.0, %v1159
    %1161 = vdwg.mxu0
    %vm1162 = vcmask 7168
    %v1164 = vsel %vm1162, %v1103, 0
    %vm1166 = vcmask 1040384
    %v1167 = vsel %vm1166, %v1120, 0
    %1169 = vmatpush.msra.mxu0 0.0
    %1170 = vmatpush.msra.mxu0 0.0
    %1171 = vmatpush.msra.mxu0 0.0
    %1172 = vmatpush.msra.mxu0 0.0
    %1173 = vmatpush.msra.mxu0 0.0
    %1174 = vmatpush.msra.mxu0 0.0
    %1175 = vmatpush.msra.mxu0 0.0
    %1176 = vmatpush.msra.mxu0 0.0
    %1177 = vmatpush.msra.mxu0 0.0
    %1178 = vmatpush.msra.mxu0 0.0
    %1179 = vmatpush.msra.mxu0 0.0
    %1180 = vmatpush.msra.mxu0 0.0
    %1181 = vmatpush.msra.mxu0 0.0
    %1182 = vmatpush.msra.mxu0 0.0
    %1183 = vmatpush.msra.mxu0 0.0
    %1184 = vmatpush.msra.mxu0 %v1167
    %1185 = vmatmul.f32.gmra.mxu0 %v1164
    %v1186 = vpop.f32.mrf.mxu0
    %v1187 = vadd.f32 0.0, %v1186
    %1188 = vdwg.mxu0
    %v1189 = vsub.f32 %v850, %v1187
    %v1190 = vmul.f32 %v1189, %v1189
    %v1191 = vsel %vm855, %v1190, 0.0
    %1192 = vadd.xlane.f32.xlu0 %v1191
    %v1193 = vpop.xlane.xlu0 %1192
    %v1194 = vrot.slane %v1193, 4
    %v1195 = vadd.f32 %v1193, %v1194
    %v1196 = vrot.slane %v1195, 2
    %v1197 = vadd.f32 %v1195, %v1196
    %v1198 = vrot.slane %v1197, 1
    %v1199 = vadd.f32 %v1197, %v1198
    %s1200 = vtos %v1199
    %v1201 = vstv %s1200
    %v1202 = vrsqrt.pop %v1201
    %v1203 = vmul.f32 %v1202, %v1201
    %v1204 = vmul.f32 %v1203, %v1202
    %v1205 = vmul.f32 0.5, %v1204
    %v1206 = vsub.f32 1.5, %v1205
    %v1207 = vmul.f32 %v1202, %v1206
    %v1208 = vmul.f32 %v1201, %v1207
    %vm1209 = vcmp.eq.f32.partialorder %v1201, inf
    %v1210 = vsel %vm1209, %v1201, %v1208
    %vm1211 = vcmp.eq.f32.partialorder %v1201, 0.0
    %v1212 = vand.u32 %v1201, 2147483648
    %v1213 = vsel %vm1211, %v1212, %v1210
    %s1214 = vtos %v1213
    %v1215 = vrcp.pop 25.0
    %v1216 = vmul.f32 25.0, %v1215
    %v1217 = vsub.f32 1.0, %v1216
    %v1218 = vmul.f32 %v1215, %v1217
    %v1219 = vadd.f32 %v1215, %v1218
    %vm1220 = vweird.f32 %v1215
    %v1221 = vsel %vm1220, %v1215, %v1219
    %s1222 = vtos %v1221
    %s1223 = smul.f32 %s1214, %s1222
    %v1224 = vsub.f32 0.0, %v1103
    %v1225 = vadd.f32 %v1103, 1e-15
    %v1226 = vlog2.pop %v1225
    %v1227 = vmul.f32 %v1226, 0.6931472
    %v1228 = vmul.f32 %v1224, %v1227
    %vm1229 = vcmask 4096
    %v1230 = vsel %vm1229, %v1228, 0.0
    %1231 = vadd.xlane.f32.xlu0 %v1230
    %v1232 = vpop.xlane.xlu0 %1231
    %v1233 = vrot.slane %v1232, 4
    %v1234 = vadd.f32 %v1232, %v1233
    %v1235 = vrot.slane %v1234, 2
    %v1236 = vadd.f32 %v1234, %v1235
    %v1237 = vrot.slane %v1236, 1
    %v1238 = vadd.f32 %v1236, %v1237
    %s1239 = vtos %v1238
    %v1240 = vrcp.pop 5.0
    %v1241 = vmul.f32 5.0, %v1240
    %v1242 = vsub.f32 1.0, %v1241
    %v1243 = vmul.f32 %v1240, %v1242
    %v1244 = vadd.f32 %v1240, %v1243
    %vm1245 = vweird.f32 %v1240
    %v1246 = vsel %vm1245, %v1240, %v1244
    %s1247 = vtos %v1246
    %s1248 = smul.f32 %s1239, %s1247
    %vm1249 = vcmask 122880
    %1250 = vst.msk [vmem:[#allocation3] sm:$0x1] %vm1249, %v1160
    %vm1251 = vcmp.eq.s32.totalorder %v119, 0
    %v1252 = vstv %s802
    %v1253 = vsel %vm1251, %v1252, 0.0
    %vm1254 = vcmp.eq.s32.totalorder %v119, 1
    %v1255 = vstv %s1223
    %v1256 = vsel %vm1254, %v1255, %v1253
    %vm1257 = vcmp.eq.s32.totalorder %v119, 2
    %v1258 = vstv %s847
    %v1259 = vsel %vm1257, %v1258, %v1256
    %vm1260 = vcmp.eq.s32.totalorder %v119, 3
    %v1261 = vstv %s1248
    %v1262 = vsel %vm1260, %v1261, %v1259
    %1263 = vst [vmem:[#allocation5] sm:$0x1] %v1262
    // Predicated region
    $region74: #{tpu_custom_call.1} parent=1 // pred_check
      _
    $region75: #{tpu_custom_call.1} parent=1 // pred_check_branch
      %1265 = sbr.rel (0) target = $region77
    $region76: #{tpu_custom_call.1} parent=1 // pred_region
      %1267 = vsyncadd [#allocation4], 0
      %s1269 = sshll.u32 [#allocation3], 4
      %s1270 = int_to_ptr.vmem [resolvable:$true] %s1269
      %s1271 = sshll.u32 %s18, 4
      %s1272 = int_to_ptr.hbm [resolvable:$true] %s1271
      %1274 = dma.vmem_to_hbm [thread:$0]  %s1270, 16, %s1272, [#allocation4]
    $region77: #{tpu_custom_call.1} parent=1 // pred_fallthru
      _
    // Predicated region
    $region78: #{tpu_custom_call.1} parent=1 // pred_check
      _
    $region79: #{tpu_custom_call.1} parent=1 // pred_check_branch
      %1276 = sbr.rel (0) target = $region81
    $region80: #{tpu_custom_call.1} parent=1 // pred_region
      %1278 = vsyncadd [#allocation6], 0
      %s1280 = sshll.u32 [#allocation5], 4
      %s1281 = int_to_ptr.vmem [resolvable:$true] %s1280
      %s1282 = sshll.u32 %s19, 4
      %s1283 = int_to_ptr.hbm [resolvable:$true] %s1282
      %1285 = dma.vmem_to_hbm [thread:$0]  %s1281, 16, %s1283, [#allocation6]
    $region81: #{tpu_custom_call.1} parent=1 // pred_fallthru
      _
    // Predicated region
    $region82: #{tpu_custom_call.1} parent=1 // pred_check
      _
    $region83: #{tpu_custom_call.1} parent=1 // pred_check_branch
      %1287 = sbr.rel (0) target = $region85
    $region84: #{tpu_custom_call.1} parent=1 // pred_region
      %1289 = dma.done [#allocation4], 16
    $region85: #{tpu_custom_call.1} parent=1 // pred_fallthru
      _
    // Predicated region
    $region86: #{tpu_custom_call.1} parent=1 // pred_check
      _
    $region87: #{tpu_custom_call.1} parent=1 // pred_check_branch
      %1291 = sbr.rel (0) target = $region89
    $region88: #{tpu_custom_call.1} parent=1 // pred_region
      %1293 = dma.done [#allocation6], 16
    $region89: #{tpu_custom_call.1} parent=1 // pred_fallthru
      _
    %1294 = vsyncpa [#allocation4], 1
    %1295 = vsyncpa [#allocation6], 1

</llo_original>
